<compile_context>
chip_gen: v6e
topology: v6e:2x2x1
jax: 0.10.0
libtpu: 0.0.40
codegen_flags: <defaults>
</compile_context>

<pallas_src>
import jax
import jax.numpy as jnp
from jax.experimental import pallas as pl
from jax.experimental.pallas import tpu as pltpu


# ---------------------------------------------------------------------------
# Fused BiLSTM layer kernel: input projection + both directions + (optional)
# pyramid pair-concat + (optional) final fc1/fc2, all in one VMEM-resident
# grid step.
# ---------------------------------------------------------------------------
def _make_bilstm_kernel(T_out, H, pyramid, fuse_fc):
    def kernel(x_ref, w_ref, b_ref, *rest):
        if fuse_fc:
            wkv_ref, bkv_ref, out_ref = rest     # out: (T_out, B, 2*mlp)
        else:
            (out_ref,) = rest                    # out: (T_out, B, 2H)

        B = x_ref.shape[1]
        # w rows: [x_fwd | x_bwd | h_fwd | h_bwd]; cols gate-major
        # [i_f i_b | f_f f_b | o_f o_b | g_f g_b]  (zeros off the block diag).
        w = w_ref[...]                           # (K, 8H)
        bias = b_ref[...]                        # (1, 8H)

        def x_pieces(t):
            # pBLSTM: concatenate two consecutive timesteps along features.
            if pyramid:
                return [x_ref[2 * t], x_ref[2 * t + 1]]
            return [x_ref[t]]

        h = jnp.zeros((B, 2 * H), jnp.float32)   # [h_fwd | h_bwd] lane-stacked
        c = jnp.zeros((B, 2 * H), jnp.float32)
        h_fwd = [None] * T_out
        h_bwd = [None] * T_out

        # Statically unrolled time loop: forward direction consumes time t,
        # backward direction consumes time T_out-1-t; one MXU matmul per step
        # covers input + recurrent projections for BOTH directions.
        for t in range(T_out):
            tb = T_out - 1 - t
            inp = jnp.concatenate(x_pieces(t) + x_pieces(tb) + [h], axis=-1)
            gates = jax.lax.dot_general(
                inp, w, (((1,), (0,)), ((), ())),
                preferred_element_type=jnp.float32) + bias       # (B, 8H)
            sig = jax.nn.sigmoid(gates[:, :6 * H])               # i, f, o
            g_g = jnp.tanh(gates[:, 6 * H:])                     # g
            i_g = sig[:, 0:2 * H]
            f_g = sig[:, 2 * H:4 * H]
            o_g = sig[:, 4 * H:6 * H]
            c = f_g * c + i_g * g_g
            h = o_g * jnp.tanh(c)
            h_fwd[t] = h[:, :H]
            h_bwd[tb] = h[:, H:]

        if fuse_fc:
            wkv = wkv_ref[...]                   # (2H, 2*mlp) = [fc1 | fc2]
            bkv = bkv_ref[...]                   # (1, 2*mlp)
            for t in range(T_out):
                ht = jnp.concatenate([h_fwd[t], h_bwd[t]], axis=-1)
                kv = jax.lax.dot_general(
                    ht, wkv, (((1,), (0,)), ((), ())),
                    preferred_element_type=jnp.float32) + bkv
                out_ref[t] = kv.astype(out_ref.dtype)            # 256-lane dense
        else:
            for t in range(T_out):
                out_ref[t] = jnp.concatenate(
                    [h_fwd[t], h_bwd[t]], axis=-1).astype(out_ref.dtype)

    return kernel


def bilstm_layer(x, packed, *, pyramid, kv_packed=None):
    """x: (T, B, F) f32 -> (T_out, B, 2H) hidden states, or (T_out, B, 2*mlp)
    fused keys|values when kv_packed is given (last layer)."""
    T_in, B, _ = x.shape
    H = packed["w"].shape[1] // 8
    T_out = T_in // 2 if pyramid else T_in
    if pyramid and T_in != 2 * T_out:
        x = x[: 2 * T_out]                       # drop odd trailing timestep

    fuse_fc = kv_packed is not None
    out_dim = kv_packed["w"].shape[1] if fuse_fc else 2 * H

    in_specs = [
        pl.BlockSpec(x.shape, lambda i: (0, 0, 0)),
        pl.BlockSpec(packed["w"].shape, lambda i: (0, 0)),
        pl.BlockSpec(packed["b"].shape, lambda i: (0, 0)),
    ]
    args = [x, packed["w"], packed["b"]]
    if fuse_fc:
        in_specs += [
            pl.BlockSpec(kv_packed["w"].shape, lambda i: (0, 0)),
            pl.BlockSpec(kv_packed["b"].shape, lambda i: (0, 0)),
        ]
        args += [kv_packed["w"], kv_packed["b"]]

    return pl.pallas_call(
        _make_bilstm_kernel(T_out, H, pyramid, fuse_fc),
        out_shape=jax.ShapeDtypeStruct((T_out, B, out_dim), jnp.float32),
        grid_spec=pltpu.PrefetchScalarGridSpec(
            num_scalar_prefetch=0,
            grid=(1,),
            in_specs=in_specs,
            out_specs=pl.BlockSpec((T_out, B, out_dim), lambda i: (0, 0, 0)),
        ),
        compiler_params=pltpu.CompilerParams(
            dimension_semantics=("arbitrary",),
            vmem_limit_bytes=32 * 1024 * 1024),
    )(*args)


# ---------------------------------------------------------------------------
# Encoder_RNN forward (Pallas path)
# ---------------------------------------------------------------------------
def encoder_rnn_forward(x, params):
    layers = ([(p, False) for p in params["lstm_packed"]]
              + [(p, True) for p in params["plstm_packed"]])
    h = x
    for idx, (p, pyr) in enumerate(layers):
        last = idx == len(layers) - 1
        h = bilstm_layer(h, p, pyramid=pyr,
                         kv_packed=params["kv_packed"] if last else None)
    T_final, B, two_m = h.shape
    M = two_m // 2
    kv = jnp.transpose(h, (1, 0, 2))             # (B, T, 2*mlp) - tiny wrapper op
    keys, values = kv[..., :M], kv[..., M:]      # leaky_relu(slope=1) == identity
    final_seq_lens = jnp.full((B,), T_final, dtype=jnp.int32)
    return keys, values, final_seq_lens


# ---------------------------------------------------------------------------
# Pure-JAX reference (uses the un-packed "logical" weights, HIGHEST precision)
# ---------------------------------------------------------------------------
def _lstm_dir_ref(x, wih, whh, b, reverse):
    T, B, _ = x.shape
    H = whh.shape[0]
    xs = x[::-1] if reverse else x

    def step(carry, xt):
        h, c = carry
        gates = (jnp.dot(xt, wih, precision=jax.lax.Precision.HIGHEST)
                 + jnp.dot(h, whh, precision=jax.lax.Precision.HIGHEST) + b)
        i = jax.nn.sigmoid(gates[:, :H])
        f = jax.nn.sigmoid(gates[:, H:2 * H])
        g = jnp.tanh(gates[:, 2 * H:3 * H])
        o = jax.nn.sigmoid(gates[:, 3 * H:])
        c = f * c + i * g
        h = o * jnp.tanh(c)
        return (h, c), h

    init = (jnp.zeros((B, H), jnp.float32), jnp.zeros((B, H), jnp.float32))
    _, hs = jax.lax.scan(step, init, xs)
    return hs[::-1] if reverse else hs


def _bilstm_ref(x, lg):
    of = _lstm_dir_ref(x, lg["wih_f"], lg["whh_f"], lg["b_f"], reverse=False)
    ob = _lstm_dir_ref(x, lg["wih_b"], lg["whh_b"], lg["b_b"], reverse=True)
    return jnp.concatenate([of, ob], axis=-1)


def _pyramid_reshape(x):
    T, B, F = x.shape
    T2 = (T // 2) * 2
    x = x[:T2]
    x = jnp.transpose(x, (1, 0, 2)).reshape(B, T2 // 2, 2 * F)
    return jnp.transpose(x, (1, 0, 2))


def encoder_rnn_reference(x, params):
    h = x
    for lg in params["lstm_logical"]:
        h = _bilstm_ref(h, lg)
    for lg in params["plstm_logical"]:
        h = _pyramid_reshape(h)
        h = _bilstm_ref(h, lg)
    T, B, _ = h.shape
    flat = jnp.transpose(h, (1, 0, 2))
    hi = jax.lax.Precision.HIGHEST
    keys = jnp.dot(flat, params["fc1_w"], precision=hi) + params["fc1_b"]
    values = jnp.dot(flat, params["fc2_w"], precision=hi) + params["fc2_b"]
    return keys, values, jnp.full((B,), T, jnp.int32)


# ---------------------------------------------------------------------------
# Parameter init + offline weight packing for the fused kernel
# ---------------------------------------------------------------------------
def _reorder_gates(w, H):
    """(K, 4H) in torch gate order [i,f,g,o] -> (K, 4, H) in kernel order [i,f,o,g]."""
    i, f, g, o = w[:, :H], w[:, H:2 * H], w[:, 2 * H:3 * H], w[:, 3 * H:]
    return jnp.stack([i, f, o, g], axis=1)


def _pack_bilstm(lg, H):
    in_eff = lg["wih_f"].shape[0]
    K = 2 * in_eff + 2 * H
    W = jnp.zeros((K, 4, 2, H), jnp.float32)
    W = W.at[:in_eff, :, 0, :].set(_reorder_gates(lg["wih_f"], H))
    W = W.at[in_eff:2 * in_eff, :, 1, :].set(_reorder_gates(lg["wih_b"], H))
    W = W.at[2 * in_eff:2 * in_eff + H, :, 0, :].set(_reorder_gates(lg["whh_f"], H))
    W = W.at[2 * in_eff + H:, :, 1, :].set(_reorder_gates(lg["whh_b"], H))
    b = jnp.zeros((4, 2, H), jnp.float32)
    b = b.at[:, 0, :].set(_reorder_gates(lg["b_f"][None, :], H)[0])
    b = b.at[:, 1, :].set(_reorder_gates(lg["b_b"][None, :], H)[0])
    return {"w": W.reshape(K, 8 * H), "b": b.reshape(1, 8 * H)}


def _init_bilstm(key, in_eff, H, scale=0.1):
    ks = jax.random.split(key, 6)
    lg = {
        "wih_f": scale * jax.random.normal(ks[0], (in_eff, 4 * H), jnp.float32),
        "whh_f": scale * jax.random.normal(ks[1], (H, 4 * H), jnp.float32),
        "b_f":   scale * jax.random.normal(ks[2], (4 * H,), jnp.float32),
        "wih_b": scale * jax.random.normal(ks[3], (in_eff, 4 * H), jnp.float32),
        "whh_b": scale * jax.random.normal(ks[4], (H, 4 * H), jnp.float32),
        "b_b":   scale * jax.random.normal(ks[5], (4 * H,), jnp.float32),
    }
    return lg, _pack_bilstm(lg, H)


if __name__ == "__main__":
    # Small deterministic config consistent with Encoder_RNN.
    embed_size = 32
    hidden_size = 32          # 4H = 128, gate blocks stay lane-aligned
    n_layers = 1
    n_plstm = 2
    mlp_output_size = 128     # fused keys|values output = 256 lanes
    T, B = 8, 4               # seq len divisible by 2**n_plstm

    root = jax.random.PRNGKey(0)
    ks = jax.random.split(root, 1 + n_layers + n_plstm + 1)

    x = jax.random.normal(ks[0], (T, B, embed_size), jnp.float32)

    lstm_logical, lstm_packed = [], []
    in_dim = embed_size
    for l in range(n_layers):
        lg, pk = _init_bilstm(ks[1 + l], in_dim, hidden_size)
        lstm_logical.append(lg)
        lstm_packed.append(pk)
        in_dim = 2 * hidden_size

    plstm_logical, plstm_packed = [], []
    for l in range(n_plstm):
        lg, pk = _init_bilstm(ks[1 + n_layers + l], 2 * in_dim, hidden_size)
        plstm_logical.append(lg)
        plstm_packed.append(pk)
        in_dim = 2 * hidden_size

    kf = jax.random.split(ks[-1], 4)
    fc1_w = 0.1 * jax.random.normal(kf[0], (2 * hidden_size, mlp_output_size), jnp.float32)
    fc1_b = 0.1 * jax.random.normal(kf[1], (mlp_output_size,), jnp.float32)
    fc2_w = 0.1 * jax.random.normal(kf[2], (2 * hidden_size, mlp_output_size), jnp.float32)
    fc2_b = 0.1 * jax.random.normal(kf[3], (mlp_output_size,), jnp.float32)

    params = {
        "lstm_packed": lstm_packed, "plstm_packed": plstm_packed,
        "lstm_logical": lstm_logical, "plstm_logical": plstm_logical,
        "kv_packed": {"w": jnp.concatenate([fc1_w, fc2_w], axis=1),
                      "b": jnp.concatenate([fc1_b, fc2_b]).reshape(1, -1)},
        "fc1_w": fc1_w, "fc1_b": fc1_b, "fc2_w": fc2_w, "fc2_b": fc2_b,
    }

    keys_out, values_out, seq_lens = encoder_rnn_forward(x, params)
    jax.block_until_ready((keys_out, values_out, seq_lens))

    ref_keys, ref_values, _ = encoder_rnn_reference(x, params)

    T_final = T // (2 ** n_plstm)
    assert keys_out.shape == (B, T_final, mlp_output_size)
    assert values_out.shape == (B, T_final, mlp_output_size)
    # Kernel uses default MXU precision (not HIGHEST) -> loosened tolerance.
    assert jnp.allclose(keys_out, ref_keys, atol=2e-2, rtol=2e-2), "keys mismatch"
    assert jnp.allclose(values_out, ref_values, atol=2e-2, rtol=2e-2), "values mismatch"

    print("KERNEL_OK")
</pallas_src>

<mosaic_0001>
module attributes {stable_mosaic.version = 11 : i64} {
  func.func @kernel(%arg0: i32, %arg1: memref<8x4x32xf32, #tpu.memory_space<vmem>>, %arg2: memref<128x256xf32, #tpu.memory_space<vmem>>, %arg3: memref<1x256xf32, #tpu.memory_space<vmem>>, %arg4: memref<8x4x64xf32, #tpu.memory_space<vmem>>) attributes {dimension_semantics = [#tpu.dimension_semantics<arbitrary>], iteration_bounds = array<i64: 1>, scalar_prefetch = 0 : i64, scratch_operands = 0 : i64, tpu.core_type = #tpu.core_type<tc>, window_params = [{pipeline_mode = #tpu.pipeline_mode<synchronous>, transform_indices = @transform_0, window_bounds = array<i64: 8, 4, 32>}, {pipeline_mode = #tpu.pipeline_mode<synchronous>, transform_indices = @transform_1, window_bounds = array<i64: 128, 256>}, {pipeline_mode = #tpu.pipeline_mode<synchronous>, transform_indices = @transform_2, window_bounds = array<i64: 1, 256>}, {pipeline_mode = #tpu.pipeline_mode<synchronous>, transform_indices = @transform_3, window_bounds = array<i64: 8, 4, 64>}]} {
    %c0 = arith.constant 0 : index
    %c0_0 = arith.constant 0 : index
    %0 = vector.load %arg2[%c0, %c0_0] : memref<128x256xf32, #tpu.memory_space<vmem>>, vector<128x256xf32>
    %c0_1 = arith.constant 0 : index
    %c0_2 = arith.constant 0 : index
    %1 = vector.load %arg3[%c0_1, %c0_2] : memref<1x256xf32, #tpu.memory_space<vmem>>, vector<1x256xf32>
    %cst = arith.constant 0.000000e+00 : f32
    %2 = vector.broadcast %cst : f32 to vector<4x64xf32>
    %cst_3 = arith.constant 0.000000e+00 : f32
    %3 = vector.broadcast %cst_3 : f32 to vector<4x64xf32>
    %c0_4 = arith.constant 0 : index
    %c0_5 = arith.constant 0 : index
    %c0_6 = arith.constant 0 : index
    %4 = vector.load %arg1[%c0_4, %c0_5, %c0_6] : memref<8x4x32xf32, #tpu.memory_space<vmem>>, vector<1x4x32xf32>
    %5 = vector.shape_cast %4 : vector<1x4x32xf32> to vector<4x32xf32>
    %c7 = arith.constant 7 : index
    %c0_7 = arith.constant 0 : index
    %c0_8 = arith.constant 0 : index
    %6 = vector.load %arg1[%c7, %c0_7, %c0_8] : memref<8x4x32xf32, #tpu.memory_space<vmem>>, vector<1x4x32xf32>
    %7 = vector.shape_cast %6 : vector<1x4x32xf32> to vector<4x32xf32>
    %8 = tpu.concatenate %5, %7, %2 in 1 : vector<4x32xf32>, vector<4x32xf32>, vector<4x64xf32> -> vector<4x128xf32>
    %cst_9 = arith.constant dense<0.000000e+00> : vector<4x256xf32>
    %9 = tpu.matmul %8, %0, %cst_9 {dimension_numbers = #tpu.dot_dimension_numbers<[1], [0], [0], [1], [0, 0, 1, 1], [], []>} : vector<4x128xf32>, vector<128x256xf32>, vector<4x256xf32> -> vector<4x256xf32>
    %10 = vector.broadcast %1 : vector<1x256xf32> to vector<4x256xf32>
    %11 = arith.addf %9, %10 : vector<4x256xf32>
    %12 = vector.extract_strided_slice %11 {offsets = [0, 0], sizes = [4, 192], strides = [1, 1]} : vector<4x256xf32> to vector<4x192xf32>
    %13 = arith.negf %12 : vector<4x192xf32>
    %14 = math.exp %13 : vector<4x192xf32>
    %cst_10 = arith.constant 1.000000e+00 : f32
    %15 = vector.broadcast %cst_10 : f32 to vector<4x192xf32>
    %16 = arith.addf %15, %14 : vector<4x192xf32>
    %17 = arith.divf %15, %16 : vector<4x192xf32>
    %18 = vector.extract_strided_slice %11 {offsets = [0, 192], sizes = [4, 64], strides = [1, 1]} : vector<4x256xf32> to vector<4x64xf32>
    %19 = math.tanh %18 : vector<4x64xf32>
    %20 = vector.extract_strided_slice %17 {offsets = [0, 0], sizes = [4, 64], strides = [1, 1]} : vector<4x192xf32> to vector<4x64xf32>
    %21 = vector.extract_strided_slice %17 {offsets = [0, 64], sizes = [4, 64], strides = [1, 1]} : vector<4x192xf32> to vector<4x64xf32>
    %22 = vector.extract_strided_slice %17 {offsets = [0, 128], sizes = [4, 64], strides = [1, 1]} : vector<4x192xf32> to vector<4x64xf32>
    %23 = arith.mulf %21, %3 : vector<4x64xf32>
    %24 = arith.mulf %20, %19 : vector<4x64xf32>
    %25 = arith.addf %23, %24 : vector<4x64xf32>
    %26 = math.tanh %25 : vector<4x64xf32>
    %27 = arith.mulf %22, %26 : vector<4x64xf32>
    %28 = vector.extract_strided_slice %27 {offsets = [0, 0], sizes = [4, 32], strides = [1, 1]} : vector<4x64xf32> to vector<4x32xf32>
    %29 = vector.extract_strided_slice %27 {offsets = [0, 32], sizes = [4, 32], strides = [1, 1]} : vector<4x64xf32> to vector<4x32xf32>
    %c1 = arith.constant 1 : index
    %c0_11 = arith.constant 0 : index
    %c0_12 = arith.constant 0 : index
    %30 = vector.load %arg1[%c1, %c0_11, %c0_12] : memref<8x4x32xf32, #tpu.memory_space<vmem>>, vector<1x4x32xf32>
    %31 = vector.shape_cast %30 : vector<1x4x32xf32> to vector<4x32xf32>
    %c6 = arith.constant 6 : index
    %c0_13 = arith.constant 0 : index
    %c0_14 = arith.constant 0 : index
    %32 = vector.load %arg1[%c6, %c0_13, %c0_14] : memref<8x4x32xf32, #tpu.memory_space<vmem>>, vector<1x4x32xf32>
    %33 = vector.shape_cast %32 : vector<1x4x32xf32> to vector<4x32xf32>
    %34 = tpu.concatenate %31, %33, %27 in 1 : vector<4x32xf32>, vector<4x32xf32>, vector<4x64xf32> -> vector<4x128xf32>
    %cst_15 = arith.constant dense<0.000000e+00> : vector<4x256xf32>
    %35 = tpu.matmul %34, %0, %cst_15 {dimension_numbers = #tpu.dot_dimension_numbers<[1], [0], [0], [1], [0, 0, 1, 1], [], []>} : vector<4x128xf32>, vector<128x256xf32>, vector<4x256xf32> -> vector<4x256xf32>
    %36 = vector.broadcast %1 : vector<1x256xf32> to vector<4x256xf32>
    %37 = arith.addf %35, %36 : vector<4x256xf32>
    %38 = vector.extract_strided_slice %37 {offsets = [0, 0], sizes = [4, 192], strides = [1, 1]} : vector<4x256xf32> to vector<4x192xf32>
    %39 = arith.negf %38 : vector<4x192xf32>
    %40 = math.exp %39 : vector<4x192xf32>
    %cst_16 = arith.constant 1.000000e+00 : f32
    %41 = vector.broadcast %cst_16 : f32 to vector<4x192xf32>
    %42 = arith.addf %41, %40 : vector<4x192xf32>
    %43 = arith.divf %41, %42 : vector<4x192xf32>
    %44 = vector.extract_strided_slice %37 {offsets = [0, 192], sizes = [4, 64], strides = [1, 1]} : vector<4x256xf32> to vector<4x64xf32>
    %45 = math.tanh %44 : vector<4x64xf32>
    %46 = vector.extract_strided_slice %43 {offsets = [0, 0], sizes = [4, 64], strides = [1, 1]} : vector<4x192xf32> to vector<4x64xf32>
    %47 = vector.extract_strided_slice %43 {offsets = [0, 64], sizes = [4, 64], strides = [1, 1]} : vector<4x192xf32> to vector<4x64xf32>
    %48 = vector.extract_strided_slice %43 {offsets = [0, 128], sizes = [4, 64], strides = [1, 1]} : vector<4x192xf32> to vector<4x64xf32>
    %49 = arith.mulf %47, %25 : vector<4x64xf32>
    %50 = arith.mulf %46, %45 : vector<4x64xf32>
    %51 = arith.addf %49, %50 : vector<4x64xf32>
    %52 = math.tanh %51 : vector<4x64xf32>
    %53 = arith.mulf %48, %52 : vector<4x64xf32>
    %54 = vector.extract_strided_slice %53 {offsets = [0, 0], sizes = [4, 32], strides = [1, 1]} : vector<4x64xf32> to vector<4x32xf32>
    %55 = vector.extract_strided_slice %53 {offsets = [0, 32], sizes = [4, 32], strides = [1, 1]} : vector<4x64xf32> to vector<4x32xf32>
    %c2 = arith.constant 2 : index
    %c0_17 = arith.constant 0 : index
    %c0_18 = arith.constant 0 : index
    %56 = vector.load %arg1[%c2, %c0_17, %c0_18] : memref<8x4x32xf32, #tpu.memory_space<vmem>>, vector<1x4x32xf32>
    %57 = vector.shape_cast %56 : vector<1x4x32xf32> to vector<4x32xf32>
    %c5 = arith.constant 5 : index
    %c0_19 = arith.constant 0 : index
    %c0_20 = arith.constant 0 : index
    %58 = vector.load %arg1[%c5, %c0_19, %c0_20] : memref<8x4x32xf32, #tpu.memory_space<vmem>>, vector<1x4x32xf32>
    %59 = vector.shape_cast %58 : vector<1x4x32xf32> to vector<4x32xf32>
    %60 = tpu.concatenate %57, %59, %53 in 1 : vector<4x32xf32>, vector<4x32xf32>, vector<4x64xf32> -> vector<4x128xf32>
    %cst_21 = arith.constant dense<0.000000e+00> : vector<4x256xf32>
    %61 = tpu.matmul %60, %0, %cst_21 {dimension_numbers = #tpu.dot_dimension_numbers<[1], [0], [0], [1], [0, 0, 1, 1], [], []>} : vector<4x128xf32>, vector<128x256xf32>, vector<4x256xf32> -> vector<4x256xf32>
    %62 = vector.broadcast %1 : vector<1x256xf32> to vector<4x256xf32>
    %63 = arith.addf %61, %62 : vector<4x256xf32>
    %64 = vector.extract_strided_slice %63 {offsets = [0, 0], sizes = [4, 192], strides = [1, 1]} : vector<4x256xf32> to vector<4x192xf32>
    %65 = arith.negf %64 : vector<4x192xf32>
    %66 = math.exp %65 : vector<4x192xf32>
    %cst_22 = arith.constant 1.000000e+00 : f32
    %67 = vector.broadcast %cst_22 : f32 to vector<4x192xf32>
    %68 = arith.addf %67, %66 : vector<4x192xf32>
    %69 = arith.divf %67, %68 : vector<4x192xf32>
    %70 = vector.extract_strided_slice %63 {offsets = [0, 192], sizes = [4, 64], strides = [1, 1]} : vector<4x256xf32> to vector<4x64xf32>
    %71 = math.tanh %70 : vector<4x64xf32>
    %72 = vector.extract_strided_slice %69 {offsets = [0, 0], sizes = [4, 64], strides = [1, 1]} : vector<4x192xf32> to vector<4x64xf32>
    %73 = vector.extract_strided_slice %69 {offsets = [0, 64], sizes = [4, 64], strides = [1, 1]} : vector<4x192xf32> to vector<4x64xf32>
    %74 = vector.extract_strided_slice %69 {offsets = [0, 128], sizes = [4, 64], strides = [1, 1]} : vector<4x192xf32> to vector<4x64xf32>
    %75 = arith.mulf %73, %51 : vector<4x64xf32>
    %76 = arith.mulf %72, %71 : vector<4x64xf32>
    %77 = arith.addf %75, %76 : vector<4x64xf32>
    %78 = math.tanh %77 : vector<4x64xf32>
    %79 = arith.mulf %74, %78 : vector<4x64xf32>
    %80 = vector.extract_strided_slice %79 {offsets = [0, 0], sizes = [4, 32], strides = [1, 1]} : vector<4x64xf32> to vector<4x32xf32>
    %81 = vector.extract_strided_slice %79 {offsets = [0, 32], sizes = [4, 32], strides = [1, 1]} : vector<4x64xf32> to vector<4x32xf32>
    %c3 = arith.constant 3 : index
    %c0_23 = arith.constant 0 : index
    %c0_24 = arith.constant 0 : index
    %82 = vector.load %arg1[%c3, %c0_23, %c0_24] : memref<8x4x32xf32, #tpu.memory_space<vmem>>, vector<1x4x32xf32>
    %83 = vector.shape_cast %82 : vector<1x4x32xf32> to vector<4x32xf32>
    %c4 = arith.constant 4 : index
    %c0_25 = arith.constant 0 : index
    %c0_26 = arith.constant 0 : index
    %84 = vector.load %arg1[%c4, %c0_25, %c0_26] : memref<8x4x32xf32, #tpu.memory_space<vmem>>, vector<1x4x32xf32>
    %85 = vector.shape_cast %84 : vector<1x4x32xf32> to vector<4x32xf32>
    %86 = tpu.concatenate %83, %85, %79 in 1 : vector<4x32xf32>, vector<4x32xf32>, vector<4x64xf32> -> vector<4x128xf32>
    %cst_27 = arith.constant dense<0.000000e+00> : vector<4x256xf32>
    %87 = tpu.matmul %86, %0, %cst_27 {dimension_numbers = #tpu.dot_dimension_numbers<[1], [0], [0], [1], [0, 0, 1, 1], [], []>} : vector<4x128xf32>, vector<128x256xf32>, vector<4x256xf32> -> vector<4x256xf32>
    %88 = vector.broadcast %1 : vector<1x256xf32> to vector<4x256xf32>
    %89 = arith.addf %87, %88 : vector<4x256xf32>
    %90 = vector.extract_strided_slice %89 {offsets = [0, 0], sizes = [4, 192], strides = [1, 1]} : vector<4x256xf32> to vector<4x192xf32>
    %91 = arith.negf %90 : vector<4x192xf32>
    %92 = math.exp %91 : vector<4x192xf32>
    %cst_28 = arith.constant 1.000000e+00 : f32
    %93 = vector.broadcast %cst_28 : f32 to vector<4x192xf32>
    %94 = arith.addf %93, %92 : vector<4x192xf32>
    %95 = arith.divf %93, %94 : vector<4x192xf32>
    %96 = vector.extract_strided_slice %89 {offsets = [0, 192], sizes = [4, 64], strides = [1, 1]} : vector<4x256xf32> to vector<4x64xf32>
    %97 = math.tanh %96 : vector<4x64xf32>
    %98 = vector.extract_strided_slice %95 {offsets = [0, 0], sizes = [4, 64], strides = [1, 1]} : vector<4x192xf32> to vector<4x64xf32>
    %99 = vector.extract_strided_slice %95 {offsets = [0, 64], sizes = [4, 64], strides = [1, 1]} : vector<4x192xf32> to vector<4x64xf32>
    %100 = vector.extract_strided_slice %95 {offsets = [0, 128], sizes = [4, 64], strides = [1, 1]} : vector<4x192xf32> to vector<4x64xf32>
    %101 = arith.mulf %99, %77 : vector<4x64xf32>
    %102 = arith.mulf %98, %97 : vector<4x64xf32>
    %103 = arith.addf %101, %102 : vector<4x64xf32>
    %104 = math.tanh %103 : vector<4x64xf32>
    %105 = arith.mulf %100, %104 : vector<4x64xf32>
    %106 = vector.extract_strided_slice %105 {offsets = [0, 0], sizes = [4, 32], strides = [1, 1]} : vector<4x64xf32> to vector<4x32xf32>
    %107 = vector.extract_strided_slice %105 {offsets = [0, 32], sizes = [4, 32], strides = [1, 1]} : vector<4x64xf32> to vector<4x32xf32>
    %c4_29 = arith.constant 4 : index
    %c0_30 = arith.constant 0 : index
    %c0_31 = arith.constant 0 : index
    %108 = vector.load %arg1[%c4_29, %c0_30, %c0_31] : memref<8x4x32xf32, #tpu.memory_space<vmem>>, vector<1x4x32xf32>
    %109 = vector.shape_cast %108 : vector<1x4x32xf32> to vector<4x32xf32>
    %c3_32 = arith.constant 3 : index
    %c0_33 = arith.constant 0 : index
    %c0_34 = arith.constant 0 : index
    %110 = vector.load %arg1[%c3_32, %c0_33, %c0_34] : memref<8x4x32xf32, #tpu.memory_space<vmem>>, vector<1x4x32xf32>
    %111 = vector.shape_cast %110 : vector<1x4x32xf32> to vector<4x32xf32>
    %112 = tpu.concatenate %109, %111, %105 in 1 : vector<4x32xf32>, vector<4x32xf32>, vector<4x64xf32> -> vector<4x128xf32>
    %cst_35 = arith.constant dense<0.000000e+00> : vector<4x256xf32>
    %113 = tpu.matmul %112, %0, %cst_35 {dimension_numbers = #tpu.dot_dimension_numbers<[1], [0], [0], [1], [0, 0, 1, 1], [], []>} : vector<4x128xf32>, vector<128x256xf32>, vector<4x256xf32> -> vector<4x256xf32>
    %114 = vector.broadcast %1 : vector<1x256xf32> to vector<4x256xf32>
    %115 = arith.addf %113, %114 : vector<4x256xf32>
    %116 = vector.extract_strided_slice %115 {offsets = [0, 0], sizes = [4, 192], strides = [1, 1]} : vector<4x256xf32> to vector<4x192xf32>
    %117 = arith.negf %116 : vector<4x192xf32>
    %118 = math.exp %117 : vector<4x192xf32>
    %cst_36 = arith.constant 1.000000e+00 : f32
    %119 = vector.broadcast %cst_36 : f32 to vector<4x192xf32>
    %120 = arith.addf %119, %118 : vector<4x192xf32>
    %121 = arith.divf %119, %120 : vector<4x192xf32>
    %122 = vector.extract_strided_slice %115 {offsets = [0, 192], sizes = [4, 64], strides = [1, 1]} : vector<4x256xf32> to vector<4x64xf32>
    %123 = math.tanh %122 : vector<4x64xf32>
    %124 = vector.extract_strided_slice %121 {offsets = [0, 0], sizes = [4, 64], strides = [1, 1]} : vector<4x192xf32> to vector<4x64xf32>
    %125 = vector.extract_strided_slice %121 {offsets = [0, 64], sizes = [4, 64], strides = [1, 1]} : vector<4x192xf32> to vector<4x64xf32>
    %126 = vector.extract_strided_slice %121 {offsets = [0, 128], sizes = [4, 64], strides = [1, 1]} : vector<4x192xf32> to vector<4x64xf32>
    %127 = arith.mulf %125, %103 : vector<4x64xf32>
    %128 = arith.mulf %124, %123 : vector<4x64xf32>
    %129 = arith.addf %127, %128 : vector<4x64xf32>
    %130 = math.tanh %129 : vector<4x64xf32>
    %131 = arith.mulf %126, %130 : vector<4x64xf32>
    %132 = vector.extract_strided_slice %131 {offsets = [0, 0], sizes = [4, 32], strides = [1, 1]} : vector<4x64xf32> to vector<4x32xf32>
    %133 = vector.extract_strided_slice %131 {offsets = [0, 32], sizes = [4, 32], strides = [1, 1]} : vector<4x64xf32> to vector<4x32xf32>
    %c5_37 = arith.constant 5 : index
    %c0_38 = arith.constant 0 : index
    %c0_39 = arith.constant 0 : index
    %134 = vector.load %arg1[%c5_37, %c0_38, %c0_39] : memref<8x4x32xf32, #tpu.memory_space<vmem>>, vector<1x4x32xf32>
    %135 = vector.shape_cast %134 : vector<1x4x32xf32> to vector<4x32xf32>
    %c2_40 = arith.constant 2 : index
    %c0_41 = arith.constant 0 : index
    %c0_42 = arith.constant 0 : index
    %136 = vector.load %arg1[%c2_40, %c0_41, %c0_42] : memref<8x4x32xf32, #tpu.memory_space<vmem>>, vector<1x4x32xf32>
    %137 = vector.shape_cast %136 : vector<1x4x32xf32> to vector<4x32xf32>
    %138 = tpu.concatenate %135, %137, %131 in 1 : vector<4x32xf32>, vector<4x32xf32>, vector<4x64xf32> -> vector<4x128xf32>
    %cst_43 = arith.constant dense<0.000000e+00> : vector<4x256xf32>
    %139 = tpu.matmul %138, %0, %cst_43 {dimension_numbers = #tpu.dot_dimension_numbers<[1], [0], [0], [1], [0, 0, 1, 1], [], []>} : vector<4x128xf32>, vector<128x256xf32>, vector<4x256xf32> -> vector<4x256xf32>
    %140 = vector.broadcast %1 : vector<1x256xf32> to vector<4x256xf32>
    %141 = arith.addf %139, %140 : vector<4x256xf32>
    %142 = vector.extract_strided_slice %141 {offsets = [0, 0], sizes = [4, 192], strides = [1, 1]} : vector<4x256xf32> to vector<4x192xf32>
    %143 = arith.negf %142 : vector<4x192xf32>
    %144 = math.exp %143 : vector<4x192xf32>
    %cst_44 = arith.constant 1.000000e+00 : f32
    %145 = vector.broadcast %cst_44 : f32 to vector<4x192xf32>
    %146 = arith.addf %145, %144 : vector<4x192xf32>
    %147 = arith.divf %145, %146 : vector<4x192xf32>
    %148 = vector.extract_strided_slice %141 {offsets = [0, 192], sizes = [4, 64], strides = [1, 1]} : vector<4x256xf32> to vector<4x64xf32>
    %149 = math.tanh %148 : vector<4x64xf32>
    %150 = vector.extract_strided_slice %147 {offsets = [0, 0], sizes = [4, 64], strides = [1, 1]} : vector<4x192xf32> to vector<4x64xf32>
    %151 = vector.extract_strided_slice %147 {offsets = [0, 64], sizes = [4, 64], strides = [1, 1]} : vector<4x192xf32> to vector<4x64xf32>
    %152 = vector.extract_strided_slice %147 {offsets = [0, 128], sizes = [4, 64], strides = [1, 1]} : vector<4x192xf32> to vector<4x64xf32>
    %153 = arith.mulf %151, %129 : vector<4x64xf32>
    %154 = arith.mulf %150, %149 : vector<4x64xf32>
    %155 = arith.addf %153, %154 : vector<4x64xf32>
    %156 = math.tanh %155 : vector<4x64xf32>
    %157 = arith.mulf %152, %156 : vector<4x64xf32>
    %158 = vector.extract_strided_slice %157 {offsets = [0, 0], sizes = [4, 32], strides = [1, 1]} : vector<4x64xf32> to vector<4x32xf32>
    %159 = vector.extract_strided_slice %157 {offsets = [0, 32], sizes = [4, 32], strides = [1, 1]} : vector<4x64xf32> to vector<4x32xf32>
    %c6_45 = arith.constant 6 : index
    %c0_46 = arith.constant 0 : index
    %c0_47 = arith.constant 0 : index
    %160 = vector.load %arg1[%c6_45, %c0_46, %c0_47] : memref<8x4x32xf32, #tpu.memory_space<vmem>>, vector<1x4x32xf32>
    %161 = vector.shape_cast %160 : vector<1x4x32xf32> to vector<4x32xf32>
    %c1_48 = arith.constant 1 : index
    %c0_49 = arith.constant 0 : index
    %c0_50 = arith.constant 0 : index
    %162 = vector.load %arg1[%c1_48, %c0_49, %c0_50] : memref<8x4x32xf32, #tpu.memory_space<vmem>>, vector<1x4x32xf32>
    %163 = vector.shape_cast %162 : vector<1x4x32xf32> to vector<4x32xf32>
    %164 = tpu.concatenate %161, %163, %157 in 1 : vector<4x32xf32>, vector<4x32xf32>, vector<4x64xf32> -> vector<4x128xf32>
    %cst_51 = arith.constant dense<0.000000e+00> : vector<4x256xf32>
    %165 = tpu.matmul %164, %0, %cst_51 {dimension_numbers = #tpu.dot_dimension_numbers<[1], [0], [0], [1], [0, 0, 1, 1], [], []>} : vector<4x128xf32>, vector<128x256xf32>, vector<4x256xf32> -> vector<4x256xf32>
    %166 = vector.broadcast %1 : vector<1x256xf32> to vector<4x256xf32>
    %167 = arith.addf %165, %166 : vector<4x256xf32>
    %168 = vector.extract_strided_slice %167 {offsets = [0, 0], sizes = [4, 192], strides = [1, 1]} : vector<4x256xf32> to vector<4x192xf32>
    %169 = arith.negf %168 : vector<4x192xf32>
    %170 = math.exp %169 : vector<4x192xf32>
    %cst_52 = arith.constant 1.000000e+00 : f32
    %171 = vector.broadcast %cst_52 : f32 to vector<4x192xf32>
    %172 = arith.addf %171, %170 : vector<4x192xf32>
    %173 = arith.divf %171, %172 : vector<4x192xf32>
    %174 = vector.extract_strided_slice %167 {offsets = [0, 192], sizes = [4, 64], strides = [1, 1]} : vector<4x256xf32> to vector<4x64xf32>
    %175 = math.tanh %174 : vector<4x64xf32>
    %176 = vector.extract_strided_slice %173 {offsets = [0, 0], sizes = [4, 64], strides = [1, 1]} : vector<4x192xf32> to vector<4x64xf32>
    %177 = vector.extract_strided_slice %173 {offsets = [0, 64], sizes = [4, 64], strides = [1, 1]} : vector<4x192xf32> to vector<4x64xf32>
    %178 = vector.extract_strided_slice %173 {offsets = [0, 128], sizes = [4, 64], strides = [1, 1]} : vector<4x192xf32> to vector<4x64xf32>
    %179 = arith.mulf %177, %155 : vector<4x64xf32>
    %180 = arith.mulf %176, %175 : vector<4x64xf32>
    %181 = arith.addf %179, %180 : vector<4x64xf32>
    %182 = math.tanh %181 : vector<4x64xf32>
    %183 = arith.mulf %178, %182 : vector<4x64xf32>
    %184 = vector.extract_strided_slice %183 {offsets = [0, 0], sizes = [4, 32], strides = [1, 1]} : vector<4x64xf32> to vector<4x32xf32>
    %185 = vector.extract_strided_slice %183 {offsets = [0, 32], sizes = [4, 32], strides = [1, 1]} : vector<4x64xf32> to vector<4x32xf32>
    %c7_53 = arith.constant 7 : index
    %c0_54 = arith.constant 0 : index
    %c0_55 = arith.constant 0 : index
    %186 = vector.load %arg1[%c7_53, %c0_54, %c0_55] : memref<8x4x32xf32, #tpu.memory_space<vmem>>, vector<1x4x32xf32>
    %187 = vector.shape_cast %186 : vector<1x4x32xf32> to vector<4x32xf32>
    %c0_56 = arith.constant 0 : index
    %c0_57 = arith.constant 0 : index
    %c0_58 = arith.constant 0 : index
    %188 = vector.load %arg1[%c0_56, %c0_57, %c0_58] : memref<8x4x32xf32, #tpu.memory_space<vmem>>, vector<1x4x32xf32>
    %189 = vector.shape_cast %188 : vector<1x4x32xf32> to vector<4x32xf32>
    %190 = tpu.concatenate %187, %189, %183 in 1 : vector<4x32xf32>, vector<4x32xf32>, vector<4x64xf32> -> vector<4x128xf32>
    %cst_59 = arith.constant dense<0.000000e+00> : vector<4x256xf32>
    %191 = tpu.matmul %190, %0, %cst_59 {dimension_numbers = #tpu.dot_dimension_numbers<[1], [0], [0], [1], [0, 0, 1, 1], [], []>} : vector<4x128xf32>, vector<128x256xf32>, vector<4x256xf32> -> vector<4x256xf32>
    %192 = vector.broadcast %1 : vector<1x256xf32> to vector<4x256xf32>
    %193 = arith.addf %191, %192 : vector<4x256xf32>
    %194 = vector.extract_strided_slice %193 {offsets = [0, 0], sizes = [4, 192], strides = [1, 1]} : vector<4x256xf32> to vector<4x192xf32>
    %195 = arith.negf %194 : vector<4x192xf32>
    %196 = math.exp %195 : vector<4x192xf32>
    %cst_60 = arith.constant 1.000000e+00 : f32
    %197 = vector.broadcast %cst_60 : f32 to vector<4x192xf32>
    %198 = arith.addf %197, %196 : vector<4x192xf32>
    %199 = arith.divf %197, %198 : vector<4x192xf32>
    %200 = vector.extract_strided_slice %193 {offsets = [0, 192], sizes = [4, 64], strides = [1, 1]} : vector<4x256xf32> to vector<4x64xf32>
    %201 = math.tanh %200 : vector<4x64xf32>
    %202 = vector.extract_strided_slice %199 {offsets = [0, 0], sizes = [4, 64], strides = [1, 1]} : vector<4x192xf32> to vector<4x64xf32>
    %203 = vector.extract_strided_slice %199 {offsets = [0, 64], sizes = [4, 64], strides = [1, 1]} : vector<4x192xf32> to vector<4x64xf32>
    %204 = vector.extract_strided_slice %199 {offsets = [0, 128], sizes = [4, 64], strides = [1, 1]} : vector<4x192xf32> to vector<4x64xf32>
    %205 = arith.mulf %203, %181 : vector<4x64xf32>
    %206 = arith.mulf %202, %201 : vector<4x64xf32>
    %207 = arith.addf %205, %206 : vector<4x64xf32>
    %208 = math.tanh %207 : vector<4x64xf32>
    %209 = arith.mulf %204, %208 : vector<4x64xf32>
    %210 = vector.extract_strided_slice %209 {offsets = [0, 0], sizes = [4, 32], strides = [1, 1]} : vector<4x64xf32> to vector<4x32xf32>
    %211 = vector.extract_strided_slice %209 {offsets = [0, 32], sizes = [4, 32], strides = [1, 1]} : vector<4x64xf32> to vector<4x32xf32>
    %212 = tpu.concatenate %28, %211 in 1 : vector<4x32xf32>, vector<4x32xf32> -> vector<4x64xf32>
    %c0_61 = arith.constant 0 : index
    %c0_62 = arith.constant 0 : index
    %c0_63 = arith.constant 0 : index
    %213 = vector.load %arg4[%c0_61, %c0_62, %c0_63] : memref<8x4x64xf32, #tpu.memory_space<vmem>>, vector<1x4x64xf32>
    %214 = vector.shape_cast %213 : vector<1x4x64xf32> to vector<4x64xf32>
    %215 = vector.shape_cast %212 : vector<4x64xf32> to vector<1x4x64xf32>
    tpu.vector_store %arg4[%c0_61, %c0_62, %c0_63], %215 {strides = array<i32>} : memref<8x4x64xf32, #tpu.memory_space<vmem>>, vector<1x4x64xf32>,
    %216 = tpu.concatenate %54, %185 in 1 : vector<4x32xf32>, vector<4x32xf32> -> vector<4x64xf32>
    %c1_64 = arith.constant 1 : index
    %c0_65 = arith.constant 0 : index
    %c0_66 = arith.constant 0 : index
    %217 = vector.load %arg4[%c1_64, %c0_65, %c0_66] : memref<8x4x64xf32, #tpu.memory_space<vmem>>, vector<1x4x64xf32>
    %218 = vector.shape_cast %217 : vector<1x4x64xf32> to vector<4x64xf32>
    %219 = vector.shape_cast %216 : vector<4x64xf32> to vector<1x4x64xf32>
    tpu.vector_store %arg4[%c1_64, %c0_65, %c0_66], %219 {strides = array<i32>} : memref<8x4x64xf32, #tpu.memory_space<vmem>>, vector<1x4x64xf32>,
    %220 = tpu.concatenate %80, %159 in 1 : vector<4x32xf32>, vector<4x32xf32> -> vector<4x64xf32>
    %c2_67 = arith.constant 2 : index
    %c0_68 = arith.constant 0 : index
    %c0_69 = arith.constant 0 : index
    %221 = vector.load %arg4[%c2_67, %c0_68, %c0_69] : memref<8x4x64xf32, #tpu.memory_space<vmem>>, vector<1x4x64xf32>
    %222 = vector.shape_cast %221 : vector<1x4x64xf32> to vector<4x64xf32>
    %223 = vector.shape_cast %220 : vector<4x64xf32> to vector<1x4x64xf32>
    tpu.vector_store %arg4[%c2_67, %c0_68, %c0_69], %223 {strides = array<i32>} : memref<8x4x64xf32, #tpu.memory_space<vmem>>, vector<1x4x64xf32>,
    %224 = tpu.concatenate %106, %133 in 1 : vector<4x32xf32>, vector<4x32xf32> -> vector<4x64xf32>
    %c3_70 = arith.constant 3 : index
    %c0_71 = arith.constant 0 : index
    %c0_72 = arith.constant 0 : index
    %225 = vector.load %arg4[%c3_70, %c0_71, %c0_72] : memref<8x4x64xf32, #tpu.memory_space<vmem>>, vector<1x4x64xf32>
    %226 = vector.shape_cast %225 : vector<1x4x64xf32> to vector<4x64xf32>
    %227 = vector.shape_cast %224 : vector<4x64xf32> to vector<1x4x64xf32>
    tpu.vector_store %arg4[%c3_70, %c0_71, %c0_72], %227 {strides = array<i32>} : memref<8x4x64xf32, #tpu.memory_space<vmem>>, vector<1x4x64xf32>,
    %228 = tpu.concatenate %132, %107 in 1 : vector<4x32xf32>, vector<4x32xf32> -> vector<4x64xf32>
    %c4_73 = arith.constant 4 : index
    %c0_74 = arith.constant 0 : index
    %c0_75 = arith.constant 0 : index
    %229 = vector.load %arg4[%c4_73, %c0_74, %c0_75] : memref<8x4x64xf32, #tpu.memory_space<vmem>>, vector<1x4x64xf32>
    %230 = vector.shape_cast %229 : vector<1x4x64xf32> to vector<4x64xf32>
    %231 = vector.shape_cast %228 : vector<4x64xf32> to vector<1x4x64xf32>
    tpu.vector_store %arg4[%c4_73, %c0_74, %c0_75], %231 {strides = array<i32>} : memref<8x4x64xf32, #tpu.memory_space<vmem>>, vector<1x4x64xf32>,
    %232 = tpu.concatenate %158, %81 in 1 : vector<4x32xf32>, vector<4x32xf32> -> vector<4x64xf32>
    %c5_76 = arith.constant 5 : index
    %c0_77 = arith.constant 0 : index
    %c0_78 = arith.constant 0 : index
    %233 = vector.load %arg4[%c5_76, %c0_77, %c0_78] : memref<8x4x64xf32, #tpu.memory_space<vmem>>, vector<1x4x64xf32>
    %234 = vector.shape_cast %233 : vector<1x4x64xf32> to vector<4x64xf32>
    %235 = vector.shape_cast %232 : vector<4x64xf32> to vector<1x4x64xf32>
    tpu.vector_store %arg4[%c5_76, %c0_77, %c0_78], %235 {strides = array<i32>} : memref<8x4x64xf32, #tpu.memory_space<vmem>>, vector<1x4x64xf32>,
    %236 = tpu.concatenate %184, %55 in 1 : vector<4x32xf32>, vector<4x32xf32> -> vector<4x64xf32>
    %c6_79 = arith.constant 6 : index
    %c0_80 = arith.constant 0 : index
    %c0_81 = arith.constant 0 : index
    %237 = vector.load %arg4[%c6_79, %c0_80, %c0_81] : memref<8x4x64xf32, #tpu.memory_space<vmem>>, vector<1x4x64xf32>
    %238 = vector.shape_cast %237 : vector<1x4x64xf32> to vector<4x64xf32>
    %239 = vector.shape_cast %236 : vector<4x64xf32> to vector<1x4x64xf32>
    tpu.vector_store %arg4[%c6_79, %c0_80, %c0_81], %239 {strides = array<i32>} : memref<8x4x64xf32, #tpu.memory_space<vmem>>, vector<1x4x64xf32>,
    %240 = tpu.concatenate %210, %29 in 1 : vector<4x32xf32>, vector<4x32xf32> -> vector<4x64xf32>
    %c7_82 = arith.constant 7 : index
    %c0_83 = arith.constant 0 : index
    %c0_84 = arith.constant 0 : index
    %241 = vector.load %arg4[%c7_82, %c0_83, %c0_84] : memref<8x4x64xf32, #tpu.memory_space<vmem>>, vector<1x4x64xf32>
    %242 = vector.shape_cast %241 : vector<1x4x64xf32> to vector<4x64xf32>
    %243 = vector.shape_cast %240 : vector<4x64xf32> to vector<1x4x64xf32>
    tpu.vector_store %arg4[%c7_82, %c0_83, %c0_84], %243 {strides = array<i32>} : memref<8x4x64xf32, #tpu.memory_space<vmem>>, vector<1x4x64xf32>,
    return
  }
  func.func @transform_0(%arg0: i32) -> (i32, i32, i32) {
    %c0_i32 = arith.constant 0 : i32
    %c0_i32_0 = arith.constant 0 : i32
    %c0_i32_1 = arith.constant 0 : i32
    %c0_i32_2 = arith.constant 0 : i32
    return %c0_i32, %c0_i32_0, %c0_i32_1 : i32, i32, i32
  }
  func.func @transform_1(%arg0: i32) -> (i32, i32) {
    %c0_i32 = arith.constant 0 : i32
    %c0_i32_0 = arith.constant 0 : i32
    %c0_i32_1 = arith.constant 0 : i32
    return %c0_i32, %c0_i32_0 : i32, i32
  }
  func.func @transform_2(%arg0: i32) -> (i32, i32) {
    %c0_i32 = arith.constant 0 : i32
    %c0_i32_0 = arith.constant 0 : i32
    %c0_i32_1 = arith.constant 0 : i32
    return %c0_i32, %c0_i32_0 : i32, i32
  }
  func.func @transform_3(%arg0: i32) -> (i32, i32, i32) {
    %c0_i32 = arith.constant 0 : i32
    %c0_i32_0 = arith.constant 0 : i32
    %c0_i32_1 = arith.constant 0 : i32
    %c0_i32_2 = arith.constant 0 : i32
    return %c0_i32, %c0_i32_0, %c0_i32_1 : i32, i32, i32
  }
}

</mosaic_0001>

<llo_original>
// kernel: tpu_custom_call.1
$region0: #{tpu_custom_call.1}
  #allocation0 [shape = 'u32[]', space=smem, size = 0x4, offset = 0x4, fixed_abs, tag = 'smem constant byte address 0x4 - core index']
  #allocation1 [shape = 'u32[144,128]{1,0:T(1,128)}', space=vmem, size = 0x12000, scoped, tag = 'internal scratch']
  %s0 = inlined_call_operand.hbm [shape: f32[8,4,32], index: 0, kind: input, shape index: {}]
  %s1 = inlined_call_operand.hbm [shape: f32[128,256], index: 1, kind: input, shape index: {}]
  %s2 = inlined_call_operand.vmem [shape: f32[1,256], index: 2, kind: input, shape index: {}]
  %s3 = inlined_call_operand.hbm [shape: f32[8,4,64], index: 3, kind: output, shape index: {}]
  %s4 = sld [smem:[#allocation0]]
  $region30: #{tpu_custom_call.1} parent=0
    _
  %s6 = ssub.s32 1, %s4
  %s7 = scalar_select 0, %s6, %s4
  $region1: #{tpu_custom_call.1} parent=0
    #allocation2 [shape = 'u8[16384]{0}', space=vmem, size = 0x4000, scoped, tag = 'input window, operand 0, single buffered']
    #allocation3 [shape = 's32[1]{0}', space=sflag, size = 0x4, scoped, tag = 'scoped memory for tpu_custom_call.1']
    #allocation4 [shape = 's32[1]{0}', space=sflag, size = 0x4, scoped, tag = 'scoped memory for tpu_custom_call.1']
    #allocation5 [shape = 'u8[131072]{0}', space=vmem, size = 0x20000, scoped, tag = 'input window, operand 1, single buffered']
    #allocation6 [shape = 's32[1]{0}', space=sflag, size = 0x4, scoped, tag = 'scoped memory for tpu_custom_call.1']
    #allocation7 [shape = 'u8[16384]{0}', space=vmem, size = 0x4000, scoped, tag = 'output window, operand 0, single buffered']
    %8 = vsyncpa [#allocation3], 0
    %9 = vsyncpa [#allocation6], 0
    %10 = vsyncpa [#allocation4], 0
    // Predicated region
    $region2: #{tpu_custom_call.1} parent=1 // pred_check
      _
    $region3: #{tpu_custom_call.1} parent=1 // pred_check_branch
      %12 = sbr.rel (0) target = $region5
    $region4: #{tpu_custom_call.1} parent=1 // pred_region
      %s14 = ssub.s32 512, 512
      %15 = vsyncadd [#allocation3], %s14
      %s16 = sshll.u32 [#allocation2], 4
      %s17 = int_to_ptr.vmem [resolvable:$true] %s16
      %22 = dma.hbm_to_vmem [thread:$0]  %s0, 512, %s17, [#allocation3], 64, 64, 4
    $region5: #{tpu_custom_call.1} parent=1 // pred_fallthru
      _
    // Predicated region
    $region6: #{tpu_custom_call.1} parent=1 // pred_check
      _
    $region7: #{tpu_custom_call.1} parent=1 // pred_check_branch
      %24 = sbr.rel (0) target = $region9
    $region8: #{tpu_custom_call.1} parent=1 // pred_region
      %s26 = ssub.s32 4096, 4096
      %27 = vsyncadd [#allocation6], %s26
      %s28 = sshll.u32 [#allocation5], 4
      %s29 = int_to_ptr.vmem [resolvable:$true] %s28
      %34 = dma.hbm_to_vmem [thread:$0]  %s1, 4096, %s29, [#allocation6], 256, 256, 16
    $region9: #{tpu_custom_call.1} parent=1 // pred_fallthru
      _
    // Predicated region
    $region10: #{tpu_custom_call.1} parent=1 // pred_check
      _
    $region11: #{tpu_custom_call.1} parent=1 // pred_check_branch
      %36 = sbr.rel (0) target = $region13
    $region12: #{tpu_custom_call.1} parent=1 // pred_region
      _
    $region13: #{tpu_custom_call.1} parent=1 // pred_fallthru
      _
    // Predicated region
    $region14: #{tpu_custom_call.1} parent=1 // pred_check
      _
    $region15: #{tpu_custom_call.1} parent=1 // pred_check_branch
      %38 = sbr.rel (0) target = $region17
    $region16: #{tpu_custom_call.1} parent=1 // pred_region
      %39 = dma.done [#allocation3], 512
    $region17: #{tpu_custom_call.1} parent=1 // pred_fallthru
      _
    // Predicated region
    $region18: #{tpu_custom_call.1} parent=1 // pred_check
      _
    $region19: #{tpu_custom_call.1} parent=1 // pred_check_branch
      %41 = sbr.rel (0) target = $region21
    $region20: #{tpu_custom_call.1} parent=1 // pred_region
      %42 = dma.done [#allocation6], 4096
    $region21: #{tpu_custom_call.1} parent=1 // pred_fallthru
      _
    %v43 = vld [vmem:[#allocation5] sm:$0xff]
    %v44 = vld [vmem:[#allocation5 + $0x8] sm:$0xff]
    %v45 = vld [vmem:[#allocation5 + $0x10] sm:$0xff]
    %v46 = vld [vmem:[#allocation5 + $0x18] sm:$0xff]
    %v47 = vld [vmem:[#allocation5 + $0x20] sm:$0xff]
    %v48 = vld [vmem:[#allocation5 + $0x28] sm:$0xff]
    %v49 = vld [vmem:[#allocation5 + $0x30] sm:$0xff]
    %v50 = vld [vmem:[#allocation5 + $0x38] sm:$0xff]
    %v51 = vld [vmem:[#allocation5 + $0x40] sm:$0xff]
    %v52 = vld [vmem:[#allocation5 + $0x48] sm:$0xff]
    %v53 = vld [vmem:[#allocation5 + $0x50] sm:$0xff]
    %v54 = vld [vmem:[#allocation5 + $0x58] sm:$0xff]
    %v55 = vld [vmem:[#allocation5 + $0x60] sm:$0xff]
    %v56 = vld [vmem:[#allocation5 + $0x68] sm:$0xff]
    %v57 = vld [vmem:[#allocation5 + $0x70] sm:$0xff]
    %v58 = vld [vmem:[#allocation5 + $0x78] sm:$0xff]
    %v59 = vld [vmem:[#allocation5 + $0x80] sm:$0xff]
    %v60 = vld [vmem:[#allocation5 + $0x88] sm:$0xff]
    %v61 = vld [vmem:[#allocation5 + $0x90] sm:$0xff]
    %v62 = vld [vmem:[#allocation5 + $0x98] sm:$0xff]
    %v63 = vld [vmem:[#allocation5 + $0xa0] sm:$0xff]
    %v64 = vld [vmem:[#allocation5 + $0xa8] sm:$0xff]
    %v65 = vld [vmem:[#allocation5 + $0xb0] sm:$0xff]
    %v66 = vld [vmem:[#allocation5 + $0xb8] sm:$0xff]
    %v67 = vld [vmem:[#allocation5 + $0xc0] sm:$0xff]
    %v68 = vld [vmem:[#allocation5 + $0xc8] sm:$0xff]
    %v69 = vld [vmem:[#allocation5 + $0xd0] sm:$0xff]
    %v70 = vld [vmem:[#allocation5 + $0xd8] sm:$0xff]
    %v71 = vld [vmem:[#allocation5 + $0xe0] sm:$0xff]
    %v72 = vld [vmem:[#allocation5 + $0xe8] sm:$0xff]
    %v73 = vld [vmem:[#allocation5 + $0xf0] sm:$0xff]
    %v74 = vld [vmem:[#allocation5 + $0xf8] sm:$0xff]
    %v75 = vld [vmem:[%s2] sm:$0x3]
    %v76 = vld [vmem:[#allocation2] sm:$0xf]
    %s77 = scalar_lea.vmem [#allocation2], 28
    %v78 = vld [vmem:[%s77] sm:$0xf]
    %80 = vrot.lane.b32.xlu0 %v78, 32
    %v81 = vpop.permute.xlu0 %80
    %vm83 = vcmask 261120
    %v84 = vsel %vm83, %v76, %v81
    %vm85 = vcmask 523264
    %v86 = vsel %vm85, %v84, 0.0
    %v88 = vlaneseq
    %v89 = vshrl.u32 %v88, 7
    %v90 = vsub.s32 0, %v89
    %v91 = vrot.slane %v75, %v90
    %v92 = vlaneseq
    %v93 = vshrl.u32 %v92, 7
    %v94 = vsub.s32 1, %v93
    %v95 = vrot.slane %v75, %v94
    %98 = vmatprep.subr.mxu0 %v74
    %99 = vmatpush1.msra.mxu0 %v73
    %100 = vmatprep.subr.mxu0 %v72
    %101 = vmatpush1.msra.mxu0 %v71
    %102 = vmatprep.subr.mxu0 %v70
    %103 = vmatpush1.msra.mxu0 %v69
    %104 = vmatprep.subr.mxu0 %v68
    %105 = vmatpush1.msra.mxu0 %v67
    %106 = vmatprep.subr.mxu0 %v66
    %107 = vmatpush1.msra.mxu0 %v65
    %108 = vmatprep.subr.mxu0 %v64
    %109 = vmatpush1.msra.mxu0 %v63
    %110 = vmatprep.subr.mxu0 %v62
    %111 = vmatpush1.msra.mxu0 %v61
    %112 = vmatprep.subr.mxu0 %v60
    %113 = vmatpush1.msra.mxu0 %v59
    %114 = vmatprep.subr.mxu0 %v58
    %115 = vmatpush1.msra.mxu0 %v57
    %116 = vmatprep.subr.mxu0 %v56
    %117 = vmatpush1.msra.mxu0 %v55
    %118 = vmatprep.subr.mxu0 %v54
    %119 = vmatpush1.msra.mxu0 %v53
    %120 = vmatprep.subr.mxu0 %v52
    %121 = vmatpush1.msra.mxu0 %v51
    %122 = vmatprep.subr.mxu0 %v50
    %123 = vmatpush1.msra.mxu0 %v49
    %124 = vmatprep.subr.mxu0 %v48
    %125 = vmatpush1.msra.mxu0 %v47
    %126 = vmatprep.subr.mxu0 %v46
    %127 = vmatpush1.msra.mxu0 %v45
    %128 = vmatprep.subr.mxu0 %v44
    %129 = vmatpush1.msra.mxu0 %v43
    %130 = vmatprep.subr.mxu0 0.0
    %131 = vmatpush2.msra.mxu0 0.0
    %132 = vmatprep.subr.mxu0 0.0
    %133 = vmatpush2.msra.mxu0 0.0
    %134 = vmatprep.subr.mxu0 0.0
    %135 = vmatpush2.msra.mxu0 0.0
    %136 = vmatprep.subr.mxu0 0.0
    %137 = vmatpush2.msra.mxu0 0.0
    %138 = vmatprep.subr.mxu0 0.0
    %139 = vmatpush2.msra.mxu0 0.0
    %140 = vmatprep.subr.mxu0 0.0
    %141 = vmatpush2.msra.mxu0 0.0
    %142 = vmatprep.subr.mxu0 0.0
    %143 = vmatpush2.msra.mxu0 0.0
    %144 = vmatprep.subr.mxu0 0.0
    %145 = vmatpush2.msra.mxu0 0.0
    %146 = vmatprep.subr.mxu0 0.0
    %147 = vmatpush2.msra.mxu0 0.0
    %148 = vmatprep.subr.mxu0 0.0
    %149 = vmatpush2.msra.mxu0 0.0
    %150 = vmatprep.subr.mxu0 0.0
    %151 = vmatpush2.msra.mxu0 0.0
    %152 = vmatprep.subr.mxu0 0.0
    %153 = vmatpush2.msra.mxu0 0.0
    %154 = vmatprep.subr.mxu0 0.0
    %155 = vmatpush2.msra.mxu0 0.0
    %156 = vmatprep.subr.mxu0 0.0
    %157 = vmatpush2.msra.mxu0 0.0
    %158 = vmatprep.subr.mxu0 0.0
    %159 = vmatpush2.msra.mxu0 0.0
    %160 = vmatprep.subr.mxu0 0.0
    %161 = vmatpush2.msra.mxu0 0.0
    %162 = vmatprep.mubr.f32.mxu0 0.0
    %163 = vmatmul.mubr.f32.gmra.mxu0 %v86
    %v164 = vpop.f32.mrf.mxu0
    %v165 = vadd.f32 %v91, %v164
    %v166 = vpop.f32.mrf.mxu0
    %v167 = vadd.f32 %v95, %v166
    %168 = vdwg.mxu0
    %v169 = vxor.u32 %v165, 2147483648
    %v170 = vxor.u32 %v167, 2147483648
    %v171 = vmul.f32 %v169, 1.442695
    %v172 = vpow.pop %v171
    %v173 = vmul.f32 %v170, 1.442695
    %v174 = vpow.pop %v173
    %v175 = vadd.f32 %v172, 1.0
    %v176 = vadd.f32 %v174, 1.0
    %v177 = vrcp.pop %v175
    %v178 = vmul.f32 1.0, %v177
    %v179 = vrcp.pop %v176
    %v180 = vmul.f32 1.0, %v179
    %v181 = vtanh.pop %v167
    %v182 = vmul.f32 %v178, 0.0
    %184 = vrot.lane.b32.xlu0 %v181, 64
    %v185 = vpop.permute.xlu0 %184
    %v187 = vmul.f32 %v178, %v185
    %189 = vrot.lane.b32.xlu0 %v187, 64
    %v190 = vpop.permute.xlu0 %189
    %v192 = vadd.f32 %v182, %v190
    %v193 = vtanh.pop %v192
    %195 = vrot.lane.b32.xlu0 %v193, 64
    %v196 = vpop.permute.xlu0 %195
    %v198 = vmul.f32 %v180, %v196
    %s199 = scalar_lea.vmem [#allocation2], 4
    %v200 = vld [vmem:[%s199] sm:$0xf]
    %s201 = scalar_lea.vmem [#allocation2], 24
    %v202 = vld [vmem:[%s201] sm:$0xf]
    %204 = vrot.lane.b32.xlu0 %v202, 32
    %v205 = vpop.permute.xlu0 %204
    %208 = vrot.lane.b32.xlu0 %v198, 64
    %v209 = vpop.permute.xlu0 %208
    %v211 = vsel %vm83, %v200, %v205
    %v212 = vsel %vm85, %v211, %v209
    %213 = vmatprep.subr.mxu0 %v74
    %214 = vmatpush1.msra.mxu0 %v73
    %215 = vmatprep.subr.mxu0 %v72
    %216 = vmatpush1.msra.mxu0 %v71
    %217 = vmatprep.subr.mxu0 %v70
    %218 = vmatpush1.msra.mxu0 %v69
    %219 = vmatprep.subr.mxu0 %v68
    %220 = vmatpush1.msra.mxu0 %v67
    %221 = vmatprep.subr.mxu0 %v66
    %222 = vmatpush1.msra.mxu0 %v65
    %223 = vmatprep.subr.mxu0 %v64
    %224 = vmatpush1.msra.mxu0 %v63
    %225 = vmatprep.subr.mxu0 %v62
    %226 = vmatpush1.msra.mxu0 %v61
    %227 = vmatprep.subr.mxu0 %v60
    %228 = vmatpush1.msra.mxu0 %v59
    %229 = vmatprep.subr.mxu0 %v58
    %230 = vmatpush1.msra.mxu0 %v57
    %231 = vmatprep.subr.mxu0 %v56
    %232 = vmatpush1.msra.mxu0 %v55
    %233 = vmatprep.subr.mxu0 %v54
    %234 = vmatpush1.msra.mxu0 %v53
    %235 = vmatprep.subr.mxu0 %v52
    %236 = vmatpush1.msra.mxu0 %v51
    %237 = vmatprep.subr.mxu0 %v50
    %238 = vmatpush1.msra.mxu0 %v49
    %239 = vmatprep.subr.mxu0 %v48
    %240 = vmatpush1.msra.mxu0 %v47
    %241 = vmatprep.subr.mxu0 %v46
    %242 = vmatpush1.msra.mxu0 %v45
    %243 = vmatprep.subr.mxu0 %v44
    %244 = vmatpush1.msra.mxu0 %v43
    %245 = vmatprep.subr.mxu0 0.0
    %246 = vmatpush2.msra.mxu0 0.0
    %247 = vmatprep.subr.mxu0 0.0
    %248 = vmatpush2.msra.mxu0 0.0
    %249 = vmatprep.subr.mxu0 0.0
    %250 = vmatpush2.msra.mxu0 0.0
    %251 = vmatprep.subr.mxu0 0.0
    %252 = vmatpush2.msra.mxu0 0.0
    %253 = vmatprep.subr.mxu0 0.0
    %254 = vmatpush2.msra.mxu0 0.0
    %255 = vmatprep.subr.mxu0 0.0
    %256 = vmatpush2.msra.mxu0 0.0
    %257 = vmatprep.subr.mxu0 0.0
    %258 = vmatpush2.msra.mxu0 0.0
    %259 = vmatprep.subr.mxu0 0.0
    %260 = vmatpush2.msra.mxu0 0.0
    %261 = vmatprep.subr.mxu0 0.0
    %262 = vmatpush2.msra.mxu0 0.0
    %263 = vmatprep.subr.mxu0 0.0
    %264 = vmatpush2.msra.mxu0 0.0
    %265 = vmatprep.subr.mxu0 0.0
    %266 = vmatpush2.msra.mxu0 0.0
    %267 = vmatprep.subr.mxu0 0.0
    %268 = vmatpush2.msra.mxu0 0.0
    %269 = vmatprep.subr.mxu0 0.0
    %270 = vmatpush2.msra.mxu0 0.0
    %271 = vmatprep.subr.mxu0 0.0
    %272 = vmatpush2.msra.mxu0 0.0
    %273 = vmatprep.subr.mxu0 0.0
    %274 = vmatpush2.msra.mxu0 0.0
    %275 = vmatprep.subr.mxu0 0.0
    %276 = vmatpush2.msra.mxu0 0.0
    %277 = vmatprep.mubr.f32.mxu0 0.0
    %278 = vmatmul.mubr.f32.gmra.mxu0 %v212
    %v279 = vpop.f32.mrf.mxu0
    %v280 = vadd.f32 %v91, %v279
    %v281 = vpop.f32.mrf.mxu0
    %v282 = vadd.f32 %v95, %v281
    %283 = vdwg.mxu0
    %v284 = vxor.u32 %v280, 2147483648
    %v285 = vxor.u32 %v282, 2147483648
    %v286 = vmul.f32 %v284, 1.442695
    %v287 = vpow.pop %v286
    %v288 = vmul.f32 %v285, 1.442695
    %v289 = vpow.pop %v288
    %v290 = vadd.f32 %v287, 1.0
    %v291 = vadd.f32 %v289, 1.0
    %v292 = vrcp.pop %v290
    %v293 = vmul.f32 1.0, %v292
    %v294 = vrcp.pop %v291
    %v295 = vmul.f32 1.0, %v294
    %v296 = vtanh.pop %v282
    %v297 = vmul.f32 %v293, %v192
    %299 = vrot.lane.b32.xlu0 %v296, 64
    %v300 = vpop.permute.xlu0 %299
    %v302 = vmul.f32 %v293, %v300
    %304 = vrot.lane.b32.xlu0 %v302, 64
    %v305 = vpop.permute.xlu0 %304
    %v307 = vadd.f32 %v297, %v305
    %v308 = vtanh.pop %v307
    %310 = vrot.lane.b32.xlu0 %v308, 64
    %v311 = vpop.permute.xlu0 %310
    %v313 = vmul.f32 %v295, %v311
    %s314 = scalar_lea.vmem [#allocation2], 8
    %v315 = vld [vmem:[%s314] sm:$0xf]
    %s316 = scalar_lea.vmem [#allocation2], 20
    %v317 = vld [vmem:[%s316] sm:$0xf]
    %319 = vrot.lane.b32.xlu0 %v317, 32
    %v320 = vpop.permute.xlu0 %319
    %323 = vrot.lane.b32.xlu0 %v313, 64
    %v324 = vpop.permute.xlu0 %323
    %v326 = vsel %vm83, %v315, %v320
    %v327 = vsel %vm85, %v326, %v324
    %328 = vmatprep.subr.mxu0 %v74
    %329 = vmatpush1.msra.mxu0 %v73
    %330 = vmatprep.subr.mxu0 %v72
    %331 = vmatpush1.msra.mxu0 %v71
    %332 = vmatprep.subr.mxu0 %v70
    %333 = vmatpush1.msra.mxu0 %v69
    %334 = vmatprep.subr.mxu0 %v68
    %335 = vmatpush1.msra.mxu0 %v67
    %336 = vmatprep.subr.mxu0 %v66
    %337 = vmatpush1.msra.mxu0 %v65
    %338 = vmatprep.subr.mxu0 %v64
    %339 = vmatpush1.msra.mxu0 %v63
    %340 = vmatprep.subr.mxu0 %v62
    %341 = vmatpush1.msra.mxu0 %v61
    %342 = vmatprep.subr.mxu0 %v60
    %343 = vmatpush1.msra.mxu0 %v59
    %344 = vmatprep.subr.mxu0 %v58
    %345 = vmatpush1.msra.mxu0 %v57
    %346 = vmatprep.subr.mxu0 %v56
    %347 = vmatpush1.msra.mxu0 %v55
    %348 = vmatprep.subr.mxu0 %v54
    %349 = vmatpush1.msra.mxu0 %v53
    %350 = vmatprep.subr.mxu0 %v52
    %351 = vmatpush1.msra.mxu0 %v51
    %352 = vmatprep.subr.mxu0 %v50
    %353 = vmatpush1.msra.mxu0 %v49
    %354 = vmatprep.subr.mxu0 %v48
    %355 = vmatpush1.msra.mxu0 %v47
    %356 = vmatprep.subr.mxu0 %v46
    %357 = vmatpush1.msra.mxu0 %v45
    %358 = vmatprep.subr.mxu0 %v44
    %359 = vmatpush1.msra.mxu0 %v43
    %360 = vmatprep.subr.mxu0 0.0
    %361 = vmatpush2.msra.mxu0 0.0
    %362 = vmatprep.subr.mxu0 0.0
    %363 = vmatpush2.msra.mxu0 0.0
    %364 = vmatprep.subr.mxu0 0.0
    %365 = vmatpush2.msra.mxu0 0.0
    %366 = vmatprep.subr.mxu0 0.0
    %367 = vmatpush2.msra.mxu0 0.0
    %368 = vmatprep.subr.mxu0 0.0
    %369 = vmatpush2.msra.mxu0 0.0
    %370 = vmatprep.subr.mxu0 0.0
    %371 = vmatpush2.msra.mxu0 0.0
    %372 = vmatprep.subr.mxu0 0.0
    %373 = vmatpush2.msra.mxu0 0.0
    %374 = vmatprep.subr.mxu0 0.0
    %375 = vmatpush2.msra.mxu0 0.0
    %376 = vmatprep.subr.mxu0 0.0
    %377 = vmatpush2.msra.mxu0 0.0
    %378 = vmatprep.subr.mxu0 0.0
    %379 = vmatpush2.msra.mxu0 0.0
    %380 = vmatprep.subr.mxu0 0.0
    %381 = vmatpush2.msra.mxu0 0.0
    %382 = vmatprep.subr.mxu0 0.0
    %383 = vmatpush2.msra.mxu0 0.0
    %384 = vmatprep.subr.mxu0 0.0
    %385 = vmatpush2.msra.mxu0 0.0
    %386 = vmatprep.subr.mxu0 0.0
    %387 = vmatpush2.msra.mxu0 0.0
    %388 = vmatprep.subr.mxu0 0.0
    %389 = vmatpush2.msra.mxu0 0.0
    %390 = vmatprep.subr.mxu0 0.0
    %391 = vmatpush2.msra.mxu0 0.0
    %392 = vmatprep.mubr.f32.mxu0 0.0
    %393 = vmatmul.mubr.f32.gmra.mxu0 %v327
    %v394 = vpop.f32.mrf.mxu0
    %v395 = vadd.f32 %v91, %v394
    %v396 = vpop.f32.mrf.mxu0
    %v397 = vadd.f32 %v95, %v396
    %398 = vdwg.mxu0
    %v399 = vxor.u32 %v395, 2147483648
    %v400 = vxor.u32 %v397, 2147483648
    %v401 = vmul.f32 %v399, 1.442695
    %v402 = vpow.pop %v401
    %v403 = vmul.f32 %v400, 1.442695
    %v404 = vpow.pop %v403
    %v405 = vadd.f32 %v402, 1.0
    %v406 = vadd.f32 %v404, 1.0
    %v407 = vrcp.pop %v405
    %v408 = vmul.f32 1.0, %v407
    %v409 = vrcp.pop %v406
    %v410 = vmul.f32 1.0, %v409
    %v411 = vtanh.pop %v397
    %v412 = vmul.f32 %v408, %v307
    %414 = vrot.lane.b32.xlu0 %v411, 64
    %v415 = vpop.permute.xlu0 %414
    %v417 = vmul.f32 %v408, %v415
    %419 = vrot.lane.b32.xlu0 %v417, 64
    %v420 = vpop.permute.xlu0 %419
    %v422 = vadd.f32 %v412, %v420
    %v423 = vtanh.pop %v422
    %425 = vrot.lane.b32.xlu0 %v423, 64
    %v426 = vpop.permute.xlu0 %425
    %v428 = vmul.f32 %v410, %v426
    %s429 = scalar_lea.vmem [#allocation2], 12
    %v430 = vld [vmem:[%s429] sm:$0xf]
    %s431 = scalar_lea.vmem [#allocation2], 16
    %v432 = vld [vmem:[%s431] sm:$0xf]
    %434 = vrot.lane.b32.xlu0 %v432, 32
    %v435 = vpop.permute.xlu0 %434
    %438 = vrot.lane.b32.xlu0 %v428, 64
    %v439 = vpop.permute.xlu0 %438
    %v441 = vsel %vm83, %v430, %v435
    %v442 = vsel %vm85, %v441, %v439
    %443 = vmatprep.subr.mxu0 %v74
    %444 = vmatpush1.msra.mxu0 %v73
    %445 = vmatprep.subr.mxu0 %v72
    %446 = vmatpush1.msra.mxu0 %v71
    %447 = vmatprep.subr.mxu0 %v70
    %448 = vmatpush1.msra.mxu0 %v69
    %449 = vmatprep.subr.mxu0 %v68
    %450 = vmatpush1.msra.mxu0 %v67
    %451 = vmatprep.subr.mxu0 %v66
    %452 = vmatpush1.msra.mxu0 %v65
    %453 = vmatprep.subr.mxu0 %v64
    %454 = vmatpush1.msra.mxu0 %v63
    %455 = vmatprep.subr.mxu0 %v62
    %456 = vmatpush1.msra.mxu0 %v61
    %457 = vmatprep.subr.mxu0 %v60
    %458 = vmatpush1.msra.mxu0 %v59
    %459 = vmatprep.subr.mxu0 %v58
    %460 = vmatpush1.msra.mxu0 %v57
    %461 = vmatprep.subr.mxu0 %v56
    %462 = vmatpush1.msra.mxu0 %v55
    %463 = vmatprep.subr.mxu0 %v54
    %464 = vmatpush1.msra.mxu0 %v53
    %465 = vmatprep.subr.mxu0 %v52
    %466 = vmatpush1.msra.mxu0 %v51
    %467 = vmatprep.subr.mxu0 %v50
    %468 = vmatpush1.msra.mxu0 %v49
    %469 = vmatprep.subr.mxu0 %v48
    %470 = vmatpush1.msra.mxu0 %v47
    %471 = vmatprep.subr.mxu0 %v46
    %472 = vmatpush1.msra.mxu0 %v45
    %473 = vmatprep.subr.mxu0 %v44
    %474 = vmatpush1.msra.mxu0 %v43
    %475 = vmatprep.subr.mxu0 0.0
    %476 = vmatpush2.msra.mxu0 0.0
    %477 = vmatprep.subr.mxu0 0.0
    %478 = vmatpush2.msra.mxu0 0.0
    %479 = vmatprep.subr.mxu0 0.0
    %480 = vmatpush2.msra.mxu0 0.0
    %481 = vmatprep.subr.mxu0 0.0
    %482 = vmatpush2.msra.mxu0 0.0
    %483 = vmatprep.subr.mxu0 0.0
    %484 = vmatpush2.msra.mxu0 0.0
    %485 = vmatprep.subr.mxu0 0.0
    %486 = vmatpush2.msra.mxu0 0.0
    %487 = vmatprep.subr.mxu0 0.0
    %488 = vmatpush2.msra.mxu0 0.0
    %489 = vmatprep.subr.mxu0 0.0
    %490 = vmatpush2.msra.mxu0 0.0
    %491 = vmatprep.subr.mxu0 0.0
    %492 = vmatpush2.msra.mxu0 0.0
    %493 = vmatprep.subr.mxu0 0.0
    %494 = vmatpush2.msra.mxu0 0.0
    %495 = vmatprep.subr.mxu0 0.0
    %496 = vmatpush2.msra.mxu0 0.0
    %497 = vmatprep.subr.mxu0 0.0
    %498 = vmatpush2.msra.mxu0 0.0
    %499 = vmatprep.subr.mxu0 0.0
    %500 = vmatpush2.msra.mxu0 0.0
    %501 = vmatprep.subr.mxu0 0.0
    %502 = vmatpush2.msra.mxu0 0.0
    %503 = vmatprep.subr.mxu0 0.0
    %504 = vmatpush2.msra.mxu0 0.0
    %505 = vmatprep.subr.mxu0 0.0
    %506 = vmatpush2.msra.mxu0 0.0
    %507 = vmatprep.mubr.f32.mxu0 0.0
    %508 = vmatmul.mubr.f32.gmra.mxu0 %v442
    %v509 = vpop.f32.mrf.mxu0
    %v510 = vadd.f32 %v91, %v509
    %v511 = vpop.f32.mrf.mxu0
    %v512 = vadd.f32 %v95, %v511
    %513 = vdwg.mxu0
    %v514 = vxor.u32 %v510, 2147483648
    %v515 = vxor.u32 %v512, 2147483648
    %v516 = vmul.f32 %v514, 1.442695
    %v517 = vpow.pop %v516
    %v518 = vmul.f32 %v515, 1.442695
    %v519 = vpow.pop %v518
    %v520 = vadd.f32 %v517, 1.0
    %v521 = vadd.f32 %v519, 1.0
    %v522 = vrcp.pop %v520
    %v523 = vmul.f32 1.0, %v522
    %v524 = vrcp.pop %v521
    %v525 = vmul.f32 1.0, %v524
    %v526 = vtanh.pop %v512
    %v527 = vmul.f32 %v523, %v422
    %529 = vrot.lane.b32.xlu0 %v526, 64
    %v530 = vpop.permute.xlu0 %529
    %v532 = vmul.f32 %v523, %v530
    %534 = vrot.lane.b32.xlu0 %v532, 64
    %v535 = vpop.permute.xlu0 %534
    %v537 = vadd.f32 %v527, %v535
    %v538 = vtanh.pop %v537
    %540 = vrot.lane.b32.xlu0 %v538, 64
    %v541 = vpop.permute.xlu0 %540
    %v543 = vmul.f32 %v525, %v541
    %545 = vrot.lane.b32.xlu0 %v430, 32
    %v546 = vpop.permute.xlu0 %545
    %549 = vrot.lane.b32.xlu0 %v543, 64
    %v550 = vpop.permute.xlu0 %549
    %v552 = vsel %vm83, %v432, %v546
    %v553 = vsel %vm85, %v552, %v550
    %554 = vmatprep.subr.mxu0 %v74
    %555 = vmatpush1.msra.mxu0 %v73
    %556 = vmatprep.subr.mxu0 %v72
    %557 = vmatpush1.msra.mxu0 %v71
    %558 = vmatprep.subr.mxu0 %v70
    %559 = vmatpush1.msra.mxu0 %v69
    %560 = vmatprep.subr.mxu0 %v68
    %561 = vmatpush1.msra.mxu0 %v67
    %562 = vmatprep.subr.mxu0 %v66
    %563 = vmatpush1.msra.mxu0 %v65
    %564 = vmatprep.subr.mxu0 %v64
    %565 = vmatpush1.msra.mxu0 %v63
    %566 = vmatprep.subr.mxu0 %v62
    %567 = vmatpush1.msra.mxu0 %v61
    %568 = vmatprep.subr.mxu0 %v60
    %569 = vmatpush1.msra.mxu0 %v59
    %570 = vmatprep.subr.mxu0 %v58
    %571 = vmatpush1.msra.mxu0 %v57
    %572 = vmatprep.subr.mxu0 %v56
    %573 = vmatpush1.msra.mxu0 %v55
    %574 = vmatprep.subr.mxu0 %v54
    %575 = vmatpush1.msra.mxu0 %v53
    %576 = vmatprep.subr.mxu0 %v52
    %577 = vmatpush1.msra.mxu0 %v51
    %578 = vmatprep.subr.mxu0 %v50
    %579 = vmatpush1.msra.mxu0 %v49
    %580 = vmatprep.subr.mxu0 %v48
    %581 = vmatpush1.msra.mxu0 %v47
    %582 = vmatprep.subr.mxu0 %v46
    %583 = vmatpush1.msra.mxu0 %v45
    %584 = vmatprep.subr.mxu0 %v44
    %585 = vmatpush1.msra.mxu0 %v43
    %586 = vmatprep.subr.mxu0 0.0
    %587 = vmatpush2.msra.mxu0 0.0
    %588 = vmatprep.subr.mxu0 0.0
    %589 = vmatpush2.msra.mxu0 0.0
    %590 = vmatprep.subr.mxu0 0.0
    %591 = vmatpush2.msra.mxu0 0.0
    %592 = vmatprep.subr.mxu0 0.0
    %593 = vmatpush2.msra.mxu0 0.0
    %594 = vmatprep.subr.mxu0 0.0
    %595 = vmatpush2.msra.mxu0 0.0
    %596 = vmatprep.subr.mxu0 0.0
    %597 = vmatpush2.msra.mxu0 0.0
    %598 = vmatprep.subr.mxu0 0.0
    %599 = vmatpush2.msra.mxu0 0.0
    %600 = vmatprep.subr.mxu0 0.0
    %601 = vmatpush2.msra.mxu0 0.0
    %602 = vmatprep.subr.mxu0 0.0
    %603 = vmatpush2.msra.mxu0 0.0
    %604 = vmatprep.subr.mxu0 0.0
    %605 = vmatpush2.msra.mxu0 0.0
    %606 = vmatprep.subr.mxu0 0.0
    %607 = vmatpush2.msra.mxu0 0.0
    %608 = vmatprep.subr.mxu0 0.0
    %609 = vmatpush2.msra.mxu0 0.0
    %610 = vmatprep.subr.mxu0 0.0
    %611 = vmatpush2.msra.mxu0 0.0
    %612 = vmatprep.subr.mxu0 0.0
    %613 = vmatpush2.msra.mxu0 0.0
    %614 = vmatprep.subr.mxu0 0.0
    %615 = vmatpush2.msra.mxu0 0.0
    %616 = vmatprep.subr.mxu0 0.0
    %617 = vmatpush2.msra.mxu0 0.0
    %618 = vmatprep.mubr.f32.mxu0 0.0
    %619 = vmatmul.mubr.f32.gmra.mxu0 %v553
    %v620 = vpop.f32.mrf.mxu0
    %v621 = vadd.f32 %v91, %v620
    %v622 = vpop.f32.mrf.mxu0
    %v623 = vadd.f32 %v95, %v622
    %624 = vdwg.mxu0
    %v625 = vxor.u32 %v621, 2147483648
    %v626 = vxor.u32 %v623, 2147483648
    %v627 = vmul.f32 %v625, 1.442695
    %v628 = vpow.pop %v627
    %v629 = vmul.f32 %v626, 1.442695
    %v630 = vpow.pop %v629
    %v631 = vadd.f32 %v628, 1.0
    %v632 = vadd.f32 %v630, 1.0
    %v633 = vrcp.pop %v631
    %v634 = vmul.f32 1.0, %v633
    %v635 = vrcp.pop %v632
    %v636 = vmul.f32 1.0, %v635
    %v637 = vtanh.pop %v623
    %v638 = vmul.f32 %v634, %v537
    %640 = vrot.lane.b32.xlu0 %v637, 64
    %v641 = vpop.permute.xlu0 %640
    %v643 = vmul.f32 %v634, %v641
    %645 = vrot.lane.b32.xlu0 %v643, 64
    %v646 = vpop.permute.xlu0 %645
    %v648 = vadd.f32 %v638, %v646
    %v649 = vtanh.pop %v648
    %651 = vrot.lane.b32.xlu0 %v649, 64
    %v652 = vpop.permute.xlu0 %651
    %v654 = vmul.f32 %v636, %v652
    %656 = vrot.lane.b32.xlu0 %v315, 32
    %v657 = vpop.permute.xlu0 %656
    %660 = vrot.lane.b32.xlu0 %v654, 64
    %v661 = vpop.permute.xlu0 %660
    %v663 = vsel %vm83, %v317, %v657
    %v664 = vsel %vm85, %v663, %v661
    %665 = vmatprep.subr.mxu0 %v74
    %666 = vmatpush1.msra.mxu0 %v73
    %667 = vmatprep.subr.mxu0 %v72
    %668 = vmatpush1.msra.mxu0 %v71
    %669 = vmatprep.subr.mxu0 %v70
    %670 = vmatpush1.msra.mxu0 %v69
    %671 = vmatprep.subr.mxu0 %v68
    %672 = vmatpush1.msra.mxu0 %v67
    %673 = vmatprep.subr.mxu0 %v66
    %674 = vmatpush1.msra.mxu0 %v65
    %675 = vmatprep.subr.mxu0 %v64
    %676 = vmatpush1.msra.mxu0 %v63
    %677 = vmatprep.subr.mxu0 %v62
    %678 = vmatpush1.msra.mxu0 %v61
    %679 = vmatprep.subr.mxu0 %v60
    %680 = vmatpush1.msra.mxu0 %v59
    %681 = vmatprep.subr.mxu0 %v58
    %682 = vmatpush1.msra.mxu0 %v57
    %683 = vmatprep.subr.mxu0 %v56
    %684 = vmatpush1.msra.mxu0 %v55
    %685 = vmatprep.subr.mxu0 %v54
    %686 = vmatpush1.msra.mxu0 %v53
    %687 = vmatprep.subr.mxu0 %v52
    %688 = vmatpush1.msra.mxu0 %v51
    %689 = vmatprep.subr.mxu0 %v50
    %690 = vmatpush1.msra.mxu0 %v49
    %691 = vmatprep.subr.mxu0 %v48
    %692 = vmatpush1.msra.mxu0 %v47
    %693 = vmatprep.subr.mxu0 %v46
    %694 = vmatpush1.msra.mxu0 %v45
    %695 = vmatprep.subr.mxu0 %v44
    %696 = vmatpush1.msra.mxu0 %v43
    %697 = vmatprep.subr.mxu0 0.0
    %698 = vmatpush2.msra.mxu0 0.0
    %699 = vmatprep.subr.mxu0 0.0
    %700 = vmatpush2.msra.mxu0 0.0
    %701 = vmatprep.subr.mxu0 0.0
    %702 = vmatpush2.msra.mxu0 0.0
    %703 = vmatprep.subr.mxu0 0.0
    %704 = vmatpush2.msra.mxu0 0.0
    %705 = vmatprep.subr.mxu0 0.0
    %706 = vmatpush2.msra.mxu0 0.0
    %707 = vmatprep.subr.mxu0 0.0
    %708 = vmatpush2.msra.mxu0 0.0
    %709 = vmatprep.subr.mxu0 0.0
    %710 = vmatpush2.msra.mxu0 0.0
    %711 = vmatprep.subr.mxu0 0.0
    %712 = vmatpush2.msra.mxu0 0.0
    %713 = vmatprep.subr.mxu0 0.0
    %714 = vmatpush2.msra.mxu0 0.0
    %715 = vmatprep.subr.mxu0 0.0
    %716 = vmatpush2.msra.mxu0 0.0
    %717 = vmatprep.subr.mxu0 0.0
    %718 = vmatpush2.msra.mxu0 0.0
    %719 = vmatprep.subr.mxu0 0.0
    %720 = vmatpush2.msra.mxu0 0.0
    %721 = vmatprep.subr.mxu0 0.0
    %722 = vmatpush2.msra.mxu0 0.0
    %723 = vmatprep.subr.mxu0 0.0
    %724 = vmatpush2.msra.mxu0 0.0
    %725 = vmatprep.subr.mxu0 0.0
    %726 = vmatpush2.msra.mxu0 0.0
    %727 = vmatprep.subr.mxu0 0.0
    %728 = vmatpush2.msra.mxu0 0.0
    %729 = vmatprep.mubr.f32.mxu0 0.0
    %730 = vmatmul.mubr.f32.gmra.mxu0 %v664
    %v731 = vpop.f32.mrf.mxu0
    %v732 = vadd.f32 %v91, %v731
    %v733 = vpop.f32.mrf.mxu0
    %v734 = vadd.f32 %v95, %v733
    %735 = vdwg.mxu0
    %v736 = vxor.u32 %v732, 2147483648
    %v737 = vxor.u32 %v734, 2147483648
    %v738 = vmul.f32 %v736, 1.442695
    %v739 = vpow.pop %v738
    %v740 = vmul.f32 %v737, 1.442695
    %v741 = vpow.pop %v740
    %v742 = vadd.f32 %v739, 1.0
    %v743 = vadd.f32 %v741, 1.0
    %v744 = vrcp.pop %v742
    %v745 = vmul.f32 1.0, %v744
    %v746 = vrcp.pop %v743
    %v747 = vmul.f32 1.0, %v746
    %v748 = vtanh.pop %v734
    %v749 = vmul.f32 %v745, %v648
    %751 = vrot.lane.b32.xlu0 %v748, 64
    %v752 = vpop.permute.xlu0 %751
    %v754 = vmul.f32 %v745, %v752
    %756 = vrot.lane.b32.xlu0 %v754, 64
    %v757 = vpop.permute.xlu0 %756
    %v759 = vadd.f32 %v749, %v757
    %v760 = vtanh.pop %v759
    %762 = vrot.lane.b32.xlu0 %v760, 64
    %v763 = vpop.permute.xlu0 %762
    %v765 = vmul.f32 %v747, %v763
    %767 = vrot.lane.b32.xlu0 %v200, 32
    %v768 = vpop.permute.xlu0 %767
    %771 = vrot.lane.b32.xlu0 %v765, 64
    %v772 = vpop.permute.xlu0 %771
    %v774 = vsel %vm83, %v202, %v768
    %v775 = vsel %vm85, %v774, %v772
    %776 = vmatprep.subr.mxu0 %v74
    %777 = vmatpush1.msra.mxu0 %v73
    %778 = vmatprep.subr.mxu0 %v72
    %779 = vmatpush1.msra.mxu0 %v71
    %780 = vmatprep.subr.mxu0 %v70
    %781 = vmatpush1.msra.mxu0 %v69
    %782 = vmatprep.subr.mxu0 %v68
    %783 = vmatpush1.msra.mxu0 %v67
    %784 = vmatprep.subr.mxu0 %v66
    %785 = vmatpush1.msra.mxu0 %v65
    %786 = vmatprep.subr.mxu0 %v64
    %787 = vmatpush1.msra.mxu0 %v63
    %788 = vmatprep.subr.mxu0 %v62
    %789 = vmatpush1.msra.mxu0 %v61
    %790 = vmatprep.subr.mxu0 %v60
    %791 = vmatpush1.msra.mxu0 %v59
    %792 = vmatprep.subr.mxu0 %v58
    %793 = vmatpush1.msra.mxu0 %v57
    %794 = vmatprep.subr.mxu0 %v56
    %795 = vmatpush1.msra.mxu0 %v55
    %796 = vmatprep.subr.mxu0 %v54
    %797 = vmatpush1.msra.mxu0 %v53
    %798 = vmatprep.subr.mxu0 %v52
    %799 = vmatpush1.msra.mxu0 %v51
    %800 = vmatprep.subr.mxu0 %v50
    %801 = vmatpush1.msra.mxu0 %v49
    %802 = vmatprep.subr.mxu0 %v48
    %803 = vmatpush1.msra.mxu0 %v47
    %804 = vmatprep.subr.mxu0 %v46
    %805 = vmatpush1.msra.mxu0 %v45
    %806 = vmatprep.subr.mxu0 %v44
    %807 = vmatpush1.msra.mxu0 %v43
    %808 = vmatprep.subr.mxu0 0.0
    %809 = vmatpush2.msra.mxu0 0.0
    %810 = vmatprep.subr.mxu0 0.0
    %811 = vmatpush2.msra.mxu0 0.0
    %812 = vmatprep.subr.mxu0 0.0
    %813 = vmatpush2.msra.mxu0 0.0
    %814 = vmatprep.subr.mxu0 0.0
    %815 = vmatpush2.msra.mxu0 0.0
    %816 = vmatprep.subr.mxu0 0.0
    %817 = vmatpush2.msra.mxu0 0.0
    %818 = vmatprep.subr.mxu0 0.0
    %819 = vmatpush2.msra.mxu0 0.0
    %820 = vmatprep.subr.mxu0 0.0
    %821 = vmatpush2.msra.mxu0 0.0
    %822 = vmatprep.subr.mxu0 0.0
    %823 = vmatpush2.msra.mxu0 0.0
    %824 = vmatprep.subr.mxu0 0.0
    %825 = vmatpush2.msra.mxu0 0.0
    %826 = vmatprep.subr.mxu0 0.0
    %827 = vmatpush2.msra.mxu0 0.0
    %828 = vmatprep.subr.mxu0 0.0
    %829 = vmatpush2.msra.mxu0 0.0
    %830 = vmatprep.subr.mxu0 0.0
    %831 = vmatpush2.msra.mxu0 0.0
    %832 = vmatprep.subr.mxu0 0.0
    %833 = vmatpush2.msra.mxu0 0.0
    %834 = vmatprep.subr.mxu0 0.0
    %835 = vmatpush2.msra.mxu0 0.0
    %836 = vmatprep.subr.mxu0 0.0
    %837 = vmatpush2.msra.mxu0 0.0
    %838 = vmatprep.subr.mxu0 0.0
    %839 = vmatpush2.msra.mxu0 0.0
    %840 = vmatprep.mubr.f32.mxu0 0.0
    %841 = vmatmul.mubr.f32.gmra.mxu0 %v775
    %v842 = vpop.f32.mrf.mxu0
    %v843 = vadd.f32 %v91, %v842
    %v844 = vpop.f32.mrf.mxu0
    %v845 = vadd.f32 %v95, %v844
    %846 = vdwg.mxu0
    %v847 = vxor.u32 %v843, 2147483648
    %v848 = vxor.u32 %v845, 2147483648
    %v849 = vmul.f32 %v847, 1.442695
    %v850 = vpow.pop %v849
    %v851 = vmul.f32 %v848, 1.442695
    %v852 = vpow.pop %v851
    %v853 = vadd.f32 %v850, 1.0
    %v854 = vadd.f32 %v852, 1.0
    %v855 = vrcp.pop %v853
    %v856 = vmul.f32 1.0, %v855
    %v857 = vrcp.pop %v854
    %v858 = vmul.f32 1.0, %v857
    %v859 = vtanh.pop %v845
    %v860 = vmul.f32 %v856, %v759
    %862 = vrot.lane.b32.xlu0 %v859, 64
    %v863 = vpop.permute.xlu0 %862
    %v865 = vmul.f32 %v856, %v863
    %867 = vrot.lane.b32.xlu0 %v865, 64
    %v868 = vpop.permute.xlu0 %867
    %v870 = vadd.f32 %v860, %v868
    %v871 = vtanh.pop %v870
    %873 = vrot.lane.b32.xlu0 %v871, 64
    %v874 = vpop.permute.xlu0 %873
    %v876 = vmul.f32 %v858, %v874
    %878 = vrot.lane.b32.xlu0 %v76, 32
    %v879 = vpop.permute.xlu0 %878
    %882 = vrot.lane.b32.xlu0 %v876, 64
    %v883 = vpop.permute.xlu0 %882
    %v885 = vsel %vm83, %v78, %v879
    %v886 = vsel %vm85, %v885, %v883
    %887 = vmatprep.subr.mxu0 %v74
    %888 = vmatpush1.msra.mxu0 %v73
    %889 = vmatprep.subr.mxu0 %v72
    %890 = vmatpush1.msra.mxu0 %v71
    %891 = vmatprep.subr.mxu0 %v70
    %892 = vmatpush1.msra.mxu0 %v69
    %893 = vmatprep.subr.mxu0 %v68
    %894 = vmatpush1.msra.mxu0 %v67
    %895 = vmatprep.subr.mxu0 %v66
    %896 = vmatpush1.msra.mxu0 %v65
    %897 = vmatprep.subr.mxu0 %v64
    %898 = vmatpush1.msra.mxu0 %v63
    %899 = vmatprep.subr.mxu0 %v62
    %900 = vmatpush1.msra.mxu0 %v61
    %901 = vmatprep.subr.mxu0 %v60
    %902 = vmatpush1.msra.mxu0 %v59
    %903 = vmatprep.subr.mxu0 %v58
    %904 = vmatpush1.msra.mxu0 %v57
    %905 = vmatprep.subr.mxu0 %v56
    %906 = vmatpush1.msra.mxu0 %v55
    %907 = vmatprep.subr.mxu0 %v54
    %908 = vmatpush1.msra.mxu0 %v53
    %909 = vmatprep.subr.mxu0 %v52
    %910 = vmatpush1.msra.mxu0 %v51
    %911 = vmatprep.subr.mxu0 %v50
    %912 = vmatpush1.msra.mxu0 %v49
    %913 = vmatprep.subr.mxu0 %v48
    %914 = vmatpush1.msra.mxu0 %v47
    %915 = vmatprep.subr.mxu0 %v46
    %916 = vmatpush1.msra.mxu0 %v45
    %917 = vmatprep.subr.mxu0 %v44
    %918 = vmatpush1.msra.mxu0 %v43
    %919 = vmatprep.subr.mxu0 0.0
    %920 = vmatpush2.msra.mxu0 0.0
    %921 = vmatprep.subr.mxu0 0.0
    %922 = vmatpush2.msra.mxu0 0.0
    %923 = vmatprep.subr.mxu0 0.0
    %924 = vmatpush2.msra.mxu0 0.0
    %925 = vmatprep.subr.mxu0 0.0
    %926 = vmatpush2.msra.mxu0 0.0
    %927 = vmatprep.subr.mxu0 0.0
    %928 = vmatpush2.msra.mxu0 0.0
    %929 = vmatprep.subr.mxu0 0.0
    %930 = vmatpush2.msra.mxu0 0.0
    %931 = vmatprep.subr.mxu0 0.0
    %932 = vmatpush2.msra.mxu0 0.0
    %933 = vmatprep.subr.mxu0 0.0
    %934 = vmatpush2.msra.mxu0 0.0
    %935 = vmatprep.subr.mxu0 0.0
    %936 = vmatpush2.msra.mxu0 0.0
    %937 = vmatprep.subr.mxu0 0.0
    %938 = vmatpush2.msra.mxu0 0.0
    %939 = vmatprep.subr.mxu0 0.0
    %940 = vmatpush2.msra.mxu0 0.0
    %941 = vmatprep.subr.mxu0 0.0
    %942 = vmatpush2.msra.mxu0 0.0
    %943 = vmatprep.subr.mxu0 0.0
    %944 = vmatpush2.msra.mxu0 0.0
    %945 = vmatprep.subr.mxu0 0.0
    %946 = vmatpush2.msra.mxu0 0.0
    %947 = vmatprep.subr.mxu0 0.0
    %948 = vmatpush2.msra.mxu0 0.0
    %949 = vmatprep.subr.mxu0 0.0
    %950 = vmatpush2.msra.mxu0 0.0
    %951 = vmatprep.mubr.f32.mxu0 0.0
    %952 = vmatmul.mubr.f32.gmra.mxu0 %v886
    %v953 = vpop.f32.mrf.mxu0
    %v954 = vadd.f32 %v91, %v953
    %v955 = vpop.f32.mrf.mxu0
    %v956 = vadd.f32 %v95, %v955
    %957 = vdwg.mxu0
    %v958 = vxor.u32 %v954, 2147483648
    %v959 = vxor.u32 %v956, 2147483648
    %v960 = vmul.f32 %v958, 1.442695
    %v961 = vpow.pop %v960
    %v962 = vmul.f32 %v959, 1.442695
    %v963 = vpow.pop %v962
    %v964 = vadd.f32 %v961, 1.0
    %v965 = vadd.f32 %v963, 1.0
    %v966 = vrcp.pop %v964
    %v967 = vmul.f32 1.0, %v966
    %v968 = vrcp.pop %v965
    %v969 = vmul.f32 1.0, %v968
    %v970 = vtanh.pop %v956
    %v971 = vmul.f32 %v967, %v870
    %973 = vrot.lane.b32.xlu0 %v970, 64
    %v974 = vpop.permute.xlu0 %973
    %v976 = vmul.f32 %v967, %v974
    %978 = vrot.lane.b32.xlu0 %v976, 64
    %v979 = vpop.permute.xlu0 %978
    %v981 = vadd.f32 %v971, %v979
    %v982 = vtanh.pop %v981
    %984 = vrot.lane.b32.xlu0 %v982, 64
    %v985 = vpop.permute.xlu0 %984
    %v987 = vmul.f32 %v969, %v985
    %v988 = vsel %vm83, %v198, %v987
    %vm989 = vcmask 519168
    %990 = vst.msk [vmem:[#allocation7] sm:$0xf] %vm989, %v988
    %v991 = vsel %vm83, %v313, %v876
    %s992 = scalar_lea.vmem [#allocation7], 4
    %993 = vst.msk [vmem:[%s992] sm:$0xf] %vm989, %v991
    %v994 = vsel %vm83, %v428, %v765
    %s995 = scalar_lea.vmem [#allocation7], 8
    %996 = vst.msk [vmem:[%s995] sm:$0xf] %vm989, %v994
    %v997 = vsel %vm83, %v543, %v654
    %s998 = scalar_lea.vmem [#allocation7], 12
    %999 = vst.msk [vmem:[%s998] sm:$0xf] %vm989, %v997
    %v1000 = vsel %vm83, %v654, %v543
    %s1001 = scalar_lea.vmem [#allocation7], 16
    %1002 = vst.msk [vmem:[%s1001] sm:$0xf] %vm989, %v1000
    %v1003 = vsel %vm83, %v765, %v428
    %s1004 = scalar_lea.vmem [#allocation7], 20
    %1005 = vst.msk [vmem:[%s1004] sm:$0xf] %vm989, %v1003
    %v1006 = vsel %vm83, %v876, %v313
    %s1007 = scalar_lea.vmem [#allocation7], 24
    %1008 = vst.msk [vmem:[%s1007] sm:$0xf] %vm989, %v1006
    %v1009 = vsel %vm83, %v987, %v198
    %s1010 = scalar_lea.vmem [#allocation7], 28
    %1011 = vst.msk [vmem:[%s1010] sm:$0xf] %vm989, %v1009
    // Predicated region
    $region22: #{tpu_custom_call.1} parent=1 // pred_check
      _
    $region23: #{tpu_custom_call.1} parent=1 // pred_check_branch
      %1013 = sbr.rel (0) target = $region25
    $region24: #{tpu_custom_call.1} parent=1 // pred_region
      %s1015 = ssub.s32 512, 512
      %1016 = vsyncadd [#allocation4], %s1015
      %s1017 = sshll.u32 [#allocation7], 4
      %s1018 = int_to_ptr.vmem [resolvable:$true] %s1017
      %1023 = dma.vmem_to_hbm [thread:$0]  %s1018, 512, %s3, [#allocation4], 64, 64, 4
    $region25: #{tpu_custom_call.1} parent=1 // pred_fallthru
      _
    // Predicated region
    $region26: #{tpu_custom_call.1} parent=1 // pred_check
      _
    $region27: #{tpu_custom_call.1} parent=1 // pred_check_branch
      %1025 = sbr.rel (0) target = $region29
    $region28: #{tpu_custom_call.1} parent=1 // pred_region
      %1026 = dma.done [#allocation4], 512
    $region29: #{tpu_custom_call.1} parent=1 // pred_fallthru
      _
    %1027 = vsyncpa [#allocation3], 1
    %1028 = vsyncpa [#allocation6], 1
    %1029 = vsyncpa [#allocation4], 1

</llo_original>
